<compile_context>
chip_gen: v7x
topology: tpu7x:2x2x1
jax: 0.10.0
libtpu: 0.0.40
codegen_flags: <defaults>
</compile_context>

<pallas_src>
import jax
import jax.numpy as jnp
from jax.experimental import pallas as pl
from jax.experimental.pallas import tpu as pltpu

DIM = 384      # imap channels
FDIM = 128     # fmap channels
P = 3          # patch size


# ---------------------------------------------------------------------------
# Kernel 1: encoder 1x1-conv projection (matmul over pixels), split outputs
# ---------------------------------------------------------------------------
def _proj_kernel(x_ref, w_ref, b_ref, f_ref, i_ref):
    # bf16 operands, f32 accumulate on the MXU; /4.0 already folded into w/b.
    acc = jnp.dot(x_ref[...], w_ref[...], preferred_element_type=jnp.float32)
    acc = acc + b_ref[...]
    # Lane-aligned (multiple-of-128) column split straight into the two output
    # blocks — no (M, 512) intermediate slab for the wrapper to re-slice.
    f_ref[...] = acc[:, :FDIM]
    i_ref[...] = acc[:, FDIM:]


def encoder_project(x, w, b, *, tm=1024):
    """x: (M, K) bf16 (K need NOT be padded to 128), w: (K, 512) bf16, b: (1, 512) f32.

    Returns (fmap_rows (M, 128) f32, imap_rows (M, 384) f32).
    """
    M, K = x.shape
    N = w.shape[1]
    assert N == FDIM + DIM
    tm = min(tm, M)
    while M % tm:                 # keep a clean divisor of M
        tm //= 2
    assert tm == M or tm % 8 == 0

    # tm=1024 f32-out footprint ~4.5 MiB double-buffered: fits default scoped
    # VMEM on v5e (16 MiB) and v6e/v7x (32 MiB); sweep tm upward if HBM allows.
    return pl.pallas_call(
        _proj_kernel,
        out_shape=(jax.ShapeDtypeStruct((M, FDIM), jnp.float32),
                   jax.ShapeDtypeStruct((M, DIM), jnp.float32)),
        grid_spec=pltpu.PrefetchScalarGridSpec(
            num_scalar_prefetch=0,
            grid=(M // tm,),
            in_specs=[
                pl.BlockSpec((tm, K), lambda i: (i, 0)),   # full-K block, no host pad
                pl.BlockSpec((K, N), lambda i: (0, 0)),    # weight resident, fetched once
                pl.BlockSpec((1, N), lambda i: (0, 0)),    # bias resident
            ],
            out_specs=(pl.BlockSpec((tm, FDIM), lambda i: (i, 0)),
                       pl.BlockSpec((tm, DIM), lambda i: (i, 0))),
        ),
        compiler_params=pltpu.CompilerParams(
            dimension_semantics=("parallel",)),
    )(x, w, b)


# ---------------------------------------------------------------------------
# Kernel 2: gmap gather — F frames per grid step, windowed DMAs from HBM
# ---------------------------------------------------------------------------
def _gmap_gather_kernel(xs_ref, ys_ref,      # SMEM scalar prefetch, flat (n*ppi,)
                        fmap_hbm,            # HBM ref (n, h, w, cf)  (memory_space=ANY)
                        gmap_out,            # VMEM out block (F, ppi, P, P, cf)
                        sems):               # DMA sems (F, ppi)
    step = pl.program_id(0)
    F, ppi = gmap_out.shape[0], gmap_out.shape[1]

    # Build every copy descriptor first: all SMEM coordinate reads and address
    # arithmetic happen before any .wait() (waits break sst->sld forwarding),
    # then start everything so all F*ppi small window DMAs overlap.
    copies = []
    for lf in range(F):
        frame = step * F + lf
        for j in range(ppi):
            x = xs_ref[frame * ppi + j]
            y = ys_ref[frame * ppi + j]
            copies.append(pltpu.make_async_copy(   # 3x3x128 f32 ~ 4.6 KB window
                fmap_hbm.at[frame, pl.ds(y - 1, P), pl.ds(x - 1, P), :],
                gmap_out.at[lf, j],
                sems.at[lf, j]))
    for cp in copies:
        cp.start()
    for cp in copies:
        cp.wait()


def _frames_per_step(n, ppi, *, max_windows=128, max_frames=8):
    # Batch frames per step to amortize grid overhead and keep many DMAs in
    # flight, but keep >= 2 grid steps so frames still split across the two
    # v7x TensorCores (no-op on single-TC v5e/v6e).
    cap = max(1, min(max_frames, max_windows // max(ppi, 1), n // 2))
    for f in range(cap, 0, -1):
        if n % f == 0:
            return f
    return 1


def patchify_gather_gmap(fmap_nhwc, xs, ys):
    """fmap_nhwc: (n, h, w, 128) f32; xs, ys: (n, ppi) int32 centers in [1, w-2]x[1, h-2]."""
    n, h, w, cf = fmap_nhwc.shape
    ppi = xs.shape[1]
    F = _frames_per_step(n, ppi)

    grid_spec = pltpu.PrefetchScalarGridSpec(
        num_scalar_prefetch=2,
        grid=(n // F,),
        in_specs=[pl.BlockSpec(memory_space=pl.ANY)],   # fmap stays in HBM
        out_specs=pl.BlockSpec((F, ppi, P, P, cf),
                               lambda s, xs_r, ys_r: (s, 0, 0, 0, 0)),
        scratch_shapes=[pltpu.SemaphoreType.DMA((F, ppi))],
    )
    # TODO(synk): for small frames (h*w*cf*2 buffers well under the v7x 64 MiB
    # VMEM cap) whole-frame BlockSpec staging + local slices would beat the
    # per-window DMAs; kept windowed DMAs so large frames stay correct.
    return pl.pallas_call(
        _gmap_gather_kernel,
        out_shape=jax.ShapeDtypeStruct((n, ppi, P, P, cf), jnp.float32),
        grid_spec=grid_spec,
        compiler_params=pltpu.CompilerParams(
            dimension_semantics=("parallel",)),
    )(xs.reshape(-1), ys.reshape(-1), fmap_nhwc)


# ---------------------------------------------------------------------------
# Patchifier.forward (MultiScale path, default random coords)
# ---------------------------------------------------------------------------
def patchifier_forward(events, images, mask, params, key, patches_per_image=8):
    # events: (b, n, c_ev, H, W), images: (b, n, 3, H, W)  -- PyTorch NCHW
    b, n, c_ev, H, W = events.shape
    assert b == 1
    h, w = H // 4, W // 4
    num = n * patches_per_image

    # TODO(synk): this early-exit must stay a host-side (concrete-mask) check;
    # a traced mask would need lax.cond with dummy outputs.
    if mask is not None and not bool(jnp.any(mask)):
        return (None, None, None, None, None, None)
    # TODO(synk): `events = events[mask]` only feeds the (unimplemented)
    # event_bias coordinate branch.

    # ---- stand-in encoder front-end: 4x4 space-to-depth (NHWC) ----
    feat = jnp.concatenate([events, images], axis=2)             # (b, n, c, H, W)
    c = feat.shape[2]
    feat = feat.reshape(b * n, c, h, 4, w, 4)
    feat = feat.transpose(0, 2, 4, 1, 3, 5).reshape(b * n * h * w, c * 16)
    # bf16 cast fuses with the transpose; no K-padding pass over the activations.
    # TODO(synk): bf16 activations lose ~3 digits vs an f32 PyTorch reference.
    x2d = feat.astype(jnp.bfloat16)

    # Reference computes (W.x + b)/4 (encoder output then /4), so folding 0.25
    # into both W and b is exact.
    w_eff = (params["w"] * 0.25).astype(jnp.bfloat16)            # (cin, 512)
    b_eff = (params["b"] * 0.25).astype(jnp.float32)             # (1, 512)

    fmap_rows, imap_rows = encoder_project(x2d, w_eff, b_eff)    # (M,128) f32, (M,384) f32
    fmap_nhwc = fmap_rows.reshape(n, h, w, FDIM)
    imap_nhwc = imap_rows.reshape(n, h, w, DIM)

    # ---- random coords (reference default branch): x in [1, w-2], y in [1, h-2] ----
    kx, ky = jax.random.split(key)
    xs = jax.random.randint(kx, (n, patches_per_image), 1, w - 1, dtype=jnp.int32)
    ys = jax.random.randint(ky, (n, patches_per_image), 1, h - 1, dtype=jnp.int32)

    # ---- gmap: 3x3x128 windows via the Pallas windowed-DMA gather ----
    gmap_p = patchify_gather_gmap(fmap_nhwc, xs, ys)             # (n, ppi, 3, 3, 128)

    fs = jnp.repeat(jnp.arange(n, dtype=jnp.int32), patches_per_image)
    xf = xs.reshape(-1)
    yf = ys.reshape(-1)

    # ---- imap: 1x1x384 gather == plain row gather in the wrapper ----
    imap_p = imap_nhwc[fs, yf, xf]                               # (num, 384)

    # ---- patches: (x, y, disp) grid is analytic for disps=None (ones) ----
    # TODO(synk): a non-constant disparity map would need gathering real disps.
    offs = jnp.arange(P, dtype=jnp.float32) - (P // 2)
    px = jnp.broadcast_to(xf.astype(jnp.float32)[:, None, None] + offs[None, None, :],
                          (num, P, P))
    py = jnp.broadcast_to(yf.astype(jnp.float32)[:, None, None] + offs[None, :, None],
                          (num, P, P))
    patches = jnp.stack([px, py, jnp.ones((num, P, P), jnp.float32)], axis=1)
    patches = patches.reshape(b, num, 3, P, P)

    # ---- clr: one full-res pixel per patch at floor(4*(coord+0.5)) = 4c+2 ----
    img_nhwc = jnp.transpose(images[0], (0, 2, 3, 1))            # (n, H, W, 3)
    clr = img_nhwc[fs, 4 * yf + 2, 4 * xf + 2].reshape(b, num, 3)

    # ---- reassemble to PyTorch shapes ----
    fmap = jnp.transpose(fmap_nhwc.reshape(b, n, h, w, FDIM), (0, 1, 4, 2, 3))
    gmap = jnp.transpose(gmap_p.reshape(num, P, P, FDIM), (0, 3, 1, 2)).reshape(b, num, FDIM, P, P)
    imap = imap_p.reshape(b, num, DIM, 1, 1)
    index = fs

    return (fmap, gmap, imap, patches, index, clr)


# ---------------------------------------------------------------------------
if __name__ == "__main__":
    key = jax.random.PRNGKey(0)
    k1, k2, k3, k4 = jax.random.split(key, 4)

    b, n, c_ev, H, W = 1, 2, 4, 64, 64            # fmap/imap resolution = 16x16
    patches_per_image = 8

    events = jax.random.normal(k1, (b, n, c_ev, H, W), jnp.float32)
    images = jax.random.uniform(k2, (b, n, 3, H, W), jnp.float32) * 255.0
    mask = jnp.ones((b, n), dtype=bool)

    cin = (c_ev + 3) * 16
    params = {
        "w": jax.random.normal(k3, (cin, FDIM + DIM), jnp.float32) * 0.02,
        "b": jnp.zeros((1, FDIM + DIM), jnp.float32),
    }

    fmap, gmap, imap, patches, index, clr = patchifier_forward(
        events, images, mask, params, k4, patches_per_image=patches_per_image)

    jax.block_until_ready((fmap, gmap, imap, patches, index, clr))
    h, w = H // 4, W // 4
    num = n * patches_per_image
    assert fmap.shape == (b, n, FDIM, h, w)
    assert gmap.shape == (b, num, FDIM, P, P)
    assert imap.shape == (b, num, DIM, 1, 1)
    assert patches.shape == (b, num, 3, P, P)
    assert index.shape == (num,)
    assert clr.shape == (b, num, 3)
    print("KERNEL_OK")
</pallas_src>

<mosaic_0001>
module attributes {stable_mosaic.version = 11 : i64} {
  func.func @_proj_kernel(%arg0: i32, %arg1: memref<512x112xbf16, #tpu.memory_space<vmem>>, %arg2: memref<112x512xbf16, #tpu.memory_space<vmem>>, %arg3: memref<1x512xf32, #tpu.memory_space<vmem>>, %arg4: memref<512x128xf32, #tpu.memory_space<vmem>>, %arg5: memref<512x384xf32, #tpu.memory_space<vmem>>) attributes {dimension_semantics = [#tpu.dimension_semantics<parallel>], iteration_bounds = array<i64: 1>, scalar_prefetch = 0 : i64, scratch_operands = 0 : i64, tpu.core_type = #tpu.core_type<tc>, window_params = [{transform_indices = @transform_0, window_bounds = array<i64: 512, 112>}, {pipeline_mode = #tpu.pipeline_mode<synchronous>, transform_indices = @transform_1, window_bounds = array<i64: 112, 512>}, {pipeline_mode = #tpu.pipeline_mode<synchronous>, transform_indices = @transform_2, window_bounds = array<i64: 1, 512>}, {transform_indices = @transform_3, window_bounds = array<i64: 512, 128>}, {transform_indices = @transform_4, window_bounds = array<i64: 512, 384>}]} {
    %c0 = arith.constant 0 : index
    %c0_0 = arith.constant 0 : index
    %0 = vector.load %arg1[%c0, %c0_0] : memref<512x112xbf16, #tpu.memory_space<vmem>>, vector<512x112xbf16>
    %c0_1 = arith.constant 0 : index
    %c0_2 = arith.constant 0 : index
    %1 = vector.load %arg2[%c0_1, %c0_2] : memref<112x512xbf16, #tpu.memory_space<vmem>>, vector<112x512xbf16>
    %cst = arith.constant dense<0.000000e+00> : vector<512x512xf32>
    %2 = tpu.matmul %0, %1, %cst {dimension_numbers = #tpu.dot_dimension_numbers<[1], [0], [0], [1], [0, 0, 1, 1], [], []>} : vector<512x112xbf16>, vector<112x512xbf16>, vector<512x512xf32> -> vector<512x512xf32>
    %c0_3 = arith.constant 0 : index
    %c0_4 = arith.constant 0 : index
    %3 = vector.load %arg3[%c0_3, %c0_4] : memref<1x512xf32, #tpu.memory_space<vmem>>, vector<1x512xf32>
    %4 = vector.broadcast %3 : vector<1x512xf32> to vector<512x512xf32>
    %5 = arith.addf %2, %4 : vector<512x512xf32>
    %6 = vector.extract_strided_slice %5 {offsets = [0, 0], sizes = [512, 128], strides = [1, 1]} : vector<512x512xf32> to vector<512x128xf32>
    %c0_5 = arith.constant 0 : index
    %c0_6 = arith.constant 0 : index
    %7 = vector.load %arg4[%c0_5, %c0_6] : memref<512x128xf32, #tpu.memory_space<vmem>>, vector<512x128xf32>
    tpu.vector_store %arg4[%c0_5, %c0_6], %6 {strides = array<i32>} : memref<512x128xf32, #tpu.memory_space<vmem>>, vector<512x128xf32>,
    %8 = vector.extract_strided_slice %5 {offsets = [0, 128], sizes = [512, 384], strides = [1, 1]} : vector<512x512xf32> to vector<512x384xf32>
    %c0_7 = arith.constant 0 : index
    %c0_8 = arith.constant 0 : index
    %9 = vector.load %arg5[%c0_7, %c0_8] : memref<512x384xf32, #tpu.memory_space<vmem>>, vector<512x384xf32>
    tpu.vector_store %arg5[%c0_7, %c0_8], %8 {strides = array<i32>} : memref<512x384xf32, #tpu.memory_space<vmem>>, vector<512x384xf32>,
    return
  }
  func.func @transform_0(%arg0: i32) -> (i32, i32) {
    %c0_i32 = arith.constant 0 : i32
    %c0_i32_0 = arith.constant 0 : i32
    return %arg0, %c0_i32 : i32, i32
  }
  func.func @transform_1(%arg0: i32) -> (i32, i32) {
    %c0_i32 = arith.constant 0 : i32
    %c0_i32_0 = arith.constant 0 : i32
    %c0_i32_1 = arith.constant 0 : i32
    return %c0_i32, %c0_i32_0 : i32, i32
  }
  func.func @transform_2(%arg0: i32) -> (i32, i32) {
    %c0_i32 = arith.constant 0 : i32
    %c0_i32_0 = arith.constant 0 : i32
    %c0_i32_1 = arith.constant 0 : i32
    return %c0_i32, %c0_i32_0 : i32, i32
  }
  func.func @transform_3(%arg0: i32) -> (i32, i32) {
    %c0_i32 = arith.constant 0 : i32
    %c0_i32_0 = arith.constant 0 : i32
    return %arg0, %c0_i32 : i32, i32
  }
  func.func @transform_4(%arg0: i32) -> (i32, i32) {
    %c0_i32 = arith.constant 0 : i32
    %c0_i32_0 = arith.constant 0 : i32
    return %arg0, %c0_i32 : i32, i32
  }
}

</mosaic_0001>

<llo_original>
// kernel: tpu_custom_call.1
$region0: #{tpu_custom_call.1}
  #allocation0 [shape = 'u32[]', space=smem, size = 0x4, offset = 0x4, fixed_abs, tag = 'smem constant byte address 0x4 - core index']
  #allocation1 [shape = 'u32[144,128]{1,0:T(1,128)}', space=vmem, size = 0x12000, scoped, tag = 'internal scratch']
  %s0 = inlined_call_operand.vmem [shape: bf16[512,112], index: 0, kind: input, shape index: {}]
  %s1 = inlined_call_operand.vmem [shape: bf16[112,512], index: 1, kind: input, shape index: {}]
  %s2 = inlined_call_operand.vmem [shape: f32[1,512], index: 2, kind: input, shape index: {}]
  %s3 = inlined_call_operand.hbm [shape: f32[512,128], index: 3, kind: output, shape index: {0}]
  %s4 = inlined_call_operand.hbm [shape: f32[512,384], index: 4, kind: output, shape index: {1}]
  %5 = xla_tuple %s3, %s4
  %s6 = sld [smem:[#allocation0]]
  $region30: #{tpu_custom_call.1} parent=0
    _
  %s8 = ssub.s32 1, %s6
  %s9 = scalar_select 0, %s8, %s6
  $region1: #{tpu_custom_call.1} parent=0
    #allocation2 [shape = 'u8[262144]{0}', space=vmem, size = 0x40000, scoped, tag = 'output window, operand 0, single buffered']
    #allocation3 [shape = 's32[1]{0}', space=sflag, size = 0x4, scoped, tag = 'scoped memory for tpu_custom_call.1']
    #allocation4 [shape = 'u8[786432]{0}', space=vmem, size = 0xc0000, scoped, tag = 'output window, operand 1, single buffered']
    #allocation5 [shape = 's32[1]{0}', space=sflag, size = 0x4, scoped, tag = 'scoped memory for tpu_custom_call.1']
    %10 = vsyncpa [#allocation3], 0
    %11 = vsyncpa [#allocation5], 0
    // Predicated region
    $region2: #{tpu_custom_call.1} parent=1 // pred_check
      _
    $region3: #{tpu_custom_call.1} parent=1 // pred_check_branch
      %13 = sbr.rel (0) target = $region5
    $region4: #{tpu_custom_call.1} parent=1 // pred_region
      _
    $region5: #{tpu_custom_call.1} parent=1 // pred_fallthru
      _
    // Predicated region
    $region6: #{tpu_custom_call.1} parent=1 // pred_check
      _
    $region7: #{tpu_custom_call.1} parent=1 // pred_check_branch
      %15 = sbr.rel (0) target = $region9
    $region8: #{tpu_custom_call.1} parent=1 // pred_region
      _
    $region9: #{tpu_custom_call.1} parent=1 // pred_fallthru
      _
    // Predicated region
    $region10: #{tpu_custom_call.1} parent=1 // pred_check
      _
    $region11: #{tpu_custom_call.1} parent=1 // pred_check_branch
      %17 = sbr.rel (0) target = $region13
    $region12: #{tpu_custom_call.1} parent=1 // pred_region
      _
    $region13: #{tpu_custom_call.1} parent=1 // pred_fallthru
      _
    %v19 = vld [vmem:[%s0] sm:$0xf]
    %v20 = vld [vmem:[%s0 + $0x4] sm:$0xf]
    %v21 = vld [vmem:[%s0 + $0x8] sm:$0xf]
    %v22 = vld [vmem:[%s0 + $0xc] sm:$0xf]
    %v23 = vld [vmem:[%s0 + $0x10] sm:$0xf]
    %v24 = vld [vmem:[%s0 + $0x14] sm:$0xf]
    %v25 = vld [vmem:[%s0 + $0x18] sm:$0xf]
    %v26 = vld [vmem:[%s0 + $0x1c] sm:$0xf]
    %v27 = vld [vmem:[%s0 + $0x20] sm:$0xf]
    %v28 = vld [vmem:[%s0 + $0x24] sm:$0xf]
    %v29 = vld [vmem:[%s0 + $0x28] sm:$0xf]
    %v30 = vld [vmem:[%s0 + $0x2c] sm:$0xf]
    %v31 = vld [vmem:[%s0 + $0x30] sm:$0xf]
    %v32 = vld [vmem:[%s0 + $0x34] sm:$0xf]
    %v33 = vld [vmem:[%s0 + $0x38] sm:$0xf]
    %v34 = vld [vmem:[%s0 + $0x3c] sm:$0xf]
    %v35 = vld [vmem:[%s0 + $0x40] sm:$0xf]
    %v36 = vld [vmem:[%s0 + $0x44] sm:$0xf]
    %v37 = vld [vmem:[%s0 + $0x48] sm:$0xf]
    %v38 = vld [vmem:[%s0 + $0x4c] sm:$0xf]
    %v39 = vld [vmem:[%s0 + $0x50] sm:$0xf]
    %v40 = vld [vmem:[%s0 + $0x54] sm:$0xf]
    %v41 = vld [vmem:[%s0 + $0x58] sm:$0xf]
    %v42 = vld [vmem:[%s0 + $0x5c] sm:$0xf]
    %v43 = vld [vmem:[%s0 + $0x60] sm:$0xf]
    %v44 = vld [vmem:[%s0 + $0x64] sm:$0xf]
    %v45 = vld [vmem:[%s0 + $0x68] sm:$0xf]
    %v46 = vld [vmem:[%s0 + $0x6c] sm:$0xf]
    %v47 = vld [vmem:[%s0 + $0x70] sm:$0xf]
    %v48 = vld [vmem:[%s0 + $0x74] sm:$0xf]
    %v49 = vld [vmem:[%s0 + $0x78] sm:$0xf]
    %v50 = vld [vmem:[%s0 + $0x7c] sm:$0xf]
    %v51 = vld [vmem:[%s0 + $0x80] sm:$0xf]
    %v52 = vld [vmem:[%s0 + $0x84] sm:$0xf]
    %v53 = vld [vmem:[%s0 + $0x88] sm:$0xf]
    %v54 = vld [vmem:[%s0 + $0x8c] sm:$0xf]
    %v55 = vld [vmem:[%s0 + $0x90] sm:$0xf]
    %v56 = vld [vmem:[%s0 + $0x94] sm:$0xf]
    %v57 = vld [vmem:[%s0 + $0x98] sm:$0xf]
    %v58 = vld [vmem:[%s0 + $0x9c] sm:$0xf]
    %v59 = vld [vmem:[%s0 + $0xa0] sm:$0xf]
    %v60 = vld [vmem:[%s0 + $0xa4] sm:$0xf]
    %v61 = vld [vmem:[%s0 + $0xa8] sm:$0xf]
    %v62 = vld [vmem:[%s0 + $0xac] sm:$0xf]
    %v63 = vld [vmem:[%s0 + $0xb0] sm:$0xf]
    %v64 = vld [vmem:[%s0 + $0xb4] sm:$0xf]
    %v65 = vld [vmem:[%s0 + $0xb8] sm:$0xf]
    %v66 = vld [vmem:[%s0 + $0xbc] sm:$0xf]
    %v67 = vld [vmem:[%s0 + $0xc0] sm:$0xf]
    %v68 = vld [vmem:[%s0 + $0xc4] sm:$0xf]
    %v69 = vld [vmem:[%s0 + $0xc8] sm:$0xf]
    %v70 = vld [vmem:[%s0 + $0xcc] sm:$0xf]
    %v71 = vld [vmem:[%s0 + $0xd0] sm:$0xf]
    %v72 = vld [vmem:[%s0 + $0xd4] sm:$0xf]
    %v73 = vld [vmem:[%s0 + $0xd8] sm:$0xf]
    %v74 = vld [vmem:[%s0 + $0xdc] sm:$0xf]
    %v75 = vld [vmem:[%s0 + $0xe0] sm:$0xf]
    %v76 = vld [vmem:[%s0 + $0xe4] sm:$0xf]
    %v77 = vld [vmem:[%s0 + $0xe8] sm:$0xf]
    %v78 = vld [vmem:[%s0 + $0xec] sm:$0xf]
    %v79 = vld [vmem:[%s0 + $0xf0] sm:$0xf]
    %v80 = vld [vmem:[%s0 + $0xf4] sm:$0xf]
    %v81 = vld [vmem:[%s0 + $0xf8] sm:$0xf]
    %v82 = vld [vmem:[%s0 + $0xfc] sm:$0xf]
    %v83 = vld [vmem:[%s1] sm:$0xff]
    %v84 = vld [vmem:[%s1 + $0x8] sm:$0xff]
    %v85 = vld [vmem:[%s1 + $0x10] sm:$0xff]
    %v86 = vld [vmem:[%s1 + $0x18] sm:$0xff]
    %v87 = vld [vmem:[%s1 + $0x20] sm:$0xff]
    %v88 = vld [vmem:[%s1 + $0x28] sm:$0xff]
    %v89 = vld [vmem:[%s1 + $0x30] sm:$0xff]
    %v90 = vld [vmem:[%s1 + $0x38] sm:$0xff]
    %v91 = vld [vmem:[%s1 + $0x40] sm:$0xff]
    %v92 = vld [vmem:[%s1 + $0x48] sm:$0xff]
    %v93 = vld [vmem:[%s1 + $0x50] sm:$0xff]
    %v94 = vld [vmem:[%s1 + $0x58] sm:$0xff]
    %v95 = vld [vmem:[%s1 + $0x60] sm:$0xff]
    %v96 = vld [vmem:[%s1 + $0x68] sm:$0xff]
    %v97 = vld [vmem:[%s1 + $0x70] sm:$0xff]
    %v98 = vld [vmem:[%s1 + $0x78] sm:$0xff]
    %v99 = vld [vmem:[%s1 + $0x80] sm:$0xff]
    %v100 = vld [vmem:[%s1 + $0x88] sm:$0xff]
    %v101 = vld [vmem:[%s1 + $0x90] sm:$0xff]
    %v102 = vld [vmem:[%s1 + $0x98] sm:$0xff]
    %v103 = vld [vmem:[%s1 + $0xa0] sm:$0xff]
    %v104 = vld [vmem:[%s1 + $0xa8] sm:$0xff]
    %v105 = vld [vmem:[%s1 + $0xb0] sm:$0xff]
    %v106 = vld [vmem:[%s1 + $0xb8] sm:$0xff]
    %v107 = vld [vmem:[%s1 + $0xc0] sm:$0xff]
    %v108 = vld [vmem:[%s1 + $0xc8] sm:$0xff]
    %v109 = vld [vmem:[%s1 + $0xd0] sm:$0xff]
    %v110 = vld [vmem:[%s1 + $0xd8] sm:$0xff]
    %v111 = vld [vmem:[%s2] sm:$0xf]
    %v113 = vlaneseq
    %v114 = vshrl.u32 %v113, 7
    %v115 = vsub.s32 0, %v114
    %v116 = vrot.slane %v111, %v115
    %v117 = vlaneseq
    %v118 = vshrl.u32 %v117, 7
    %v119 = vsub.s32 1, %v118
    %v120 = vrot.slane %v111, %v119
    %v121 = vlaneseq
    %v122 = vshrl.u32 %v121, 7
    %v123 = vsub.s32 2, %v122
    %v124 = vrot.slane %v111, %v123
    %v125 = vlaneseq
    %v126 = vshrl.u32 %v125, 7
    %v127 = vsub.s32 3, %v126
    %v128 = vrot.slane %v111, %v127
    %v197 = vunpack.c.l.b16 %v19
    %v198 = vunpack.c.l.b16 %v20
    %v199 = vunpack.c.l.b16 %v21
    %v200 = vunpack.c.l.b16 %v22
    %v201 = vunpack.c.l.b16 %v23
    %v202 = vunpack.c.l.b16 %v24
    %v203 = vunpack.c.l.b16 %v25
    %v204 = vunpack.c.l.b16 %v26
    %v205 = vunpack.c.l.b16 %v27
    %v206 = vunpack.c.l.b16 %v28
    %v207 = vunpack.c.l.b16 %v29
    %v208 = vunpack.c.l.b16 %v30
    %v209 = vunpack.c.l.b16 %v31
    %v210 = vunpack.c.l.b16 %v32
    %v211 = vunpack.c.l.b16 %v33
    %v212 = vunpack.c.l.b16 %v34
    %v213 = vunpack.c.l.b16 %v35
    %v214 = vunpack.c.l.b16 %v36
    %v215 = vunpack.c.l.b16 %v37
    %v216 = vunpack.c.l.b16 %v38
    %v217 = vunpack.c.l.b16 %v39
    %v218 = vunpack.c.l.b16 %v40
    %v219 = vunpack.c.l.b16 %v41
    %v220 = vunpack.c.l.b16 %v42
    %v221 = vunpack.c.l.b16 %v43
    %v222 = vunpack.c.l.b16 %v44
    %v223 = vunpack.c.l.b16 %v45
    %v224 = vunpack.c.l.b16 %v46
    %v225 = vunpack.c.l.b16 %v47
    %v226 = vunpack.c.l.b16 %v48
    %v227 = vunpack.c.l.b16 %v49
    %v228 = vunpack.c.l.b16 %v50
    %v229 = vunpack.c.l.b16 %v51
    %v230 = vunpack.c.l.b16 %v52
    %v231 = vunpack.c.l.b16 %v53
    %v232 = vunpack.c.l.b16 %v54
    %v233 = vunpack.c.l.b16 %v55
    %v234 = vunpack.c.l.b16 %v56
    %v235 = vunpack.c.l.b16 %v57
    %v236 = vunpack.c.l.b16 %v58
    %v237 = vunpack.c.l.b16 %v59
    %v238 = vunpack.c.l.b16 %v60
    %v239 = vunpack.c.l.b16 %v61
    %v240 = vunpack.c.l.b16 %v62
    %v241 = vunpack.c.l.b16 %v63
    %v242 = vunpack.c.l.b16 %v64
    %v243 = vunpack.c.l.b16 %v65
    %v244 = vunpack.c.l.b16 %v66
    %v245 = vunpack.c.l.b16 %v67
    %v246 = vunpack.c.l.b16 %v68
    %v247 = vunpack.c.l.b16 %v69
    %v248 = vunpack.c.l.b16 %v70
    %v249 = vunpack.c.l.b16 %v71
    %v250 = vunpack.c.l.b16 %v72
    %v251 = vunpack.c.l.b16 %v73
    %v252 = vunpack.c.l.b16 %v74
    %v253 = vunpack.c.l.b16 %v75
    %v254 = vunpack.c.l.b16 %v76
    %v255 = vunpack.c.l.b16 %v77
    %v256 = vunpack.c.l.b16 %v78
    %v257 = vunpack.c.l.b16 %v79
    %v258 = vunpack.c.l.b16 %v80
    %v259 = vunpack.c.l.b16 %v81
    %v260 = vunpack.c.l.b16 %v82
    %v261 = vpack.c.b16 %v198, %v197
    %v262 = vpack.c.b16 %v200, %v199
    %v263 = vpack.c.b16 %v202, %v201
    %v264 = vpack.c.b16 %v204, %v203
    %v265 = vpack.c.b16 %v206, %v205
    %v266 = vpack.c.b16 %v208, %v207
    %v267 = vpack.c.b16 %v210, %v209
    %v268 = vpack.c.b16 %v212, %v211
    %v269 = vpack.c.b16 %v214, %v213
    %v270 = vpack.c.b16 %v216, %v215
    %v271 = vpack.c.b16 %v218, %v217
    %v272 = vpack.c.b16 %v220, %v219
    %v273 = vpack.c.b16 %v222, %v221
    %v274 = vpack.c.b16 %v224, %v223
    %v275 = vpack.c.b16 %v226, %v225
    %v276 = vpack.c.b16 %v228, %v227
    %v277 = vpack.c.b16 %v230, %v229
    %v278 = vpack.c.b16 %v232, %v231
    %v279 = vpack.c.b16 %v234, %v233
    %v280 = vpack.c.b16 %v236, %v235
    %v281 = vpack.c.b16 %v238, %v237
    %v282 = vpack.c.b16 %v240, %v239
    %v283 = vpack.c.b16 %v242, %v241
    %v284 = vpack.c.b16 %v244, %v243
    %v285 = vpack.c.b16 %v246, %v245
    %v286 = vpack.c.b16 %v248, %v247
    %v287 = vpack.c.b16 %v250, %v249
    %v288 = vpack.c.b16 %v252, %v251
    %v289 = vpack.c.b16 %v254, %v253
    %v290 = vpack.c.b16 %v256, %v255
    %v291 = vpack.c.b16 %v258, %v257
    %v292 = vpack.c.b16 %v260, %v259
    %v321 = vunpack.c.l.b16 %v83
    %v322 = vunpack.c.h.b16 %v83
    %v323 = vunpack.c.l.b16 %v84
    %v324 = vunpack.c.h.b16 %v84
    %v325 = vunpack.c.l.b16 %v85
    %v326 = vunpack.c.h.b16 %v85
    %v327 = vunpack.c.l.b16 %v86
    %v328 = vunpack.c.h.b16 %v86
    %v329 = vunpack.c.l.b16 %v87
    %v330 = vunpack.c.h.b16 %v87
    %v331 = vunpack.c.l.b16 %v88
    %v332 = vunpack.c.h.b16 %v88
    %v333 = vunpack.c.l.b16 %v89
    %v334 = vunpack.c.h.b16 %v89
    %v335 = vunpack.c.l.b16 %v90
    %v336 = vunpack.c.h.b16 %v90
    %v337 = vunpack.c.l.b16 %v91
    %v338 = vunpack.c.h.b16 %v91
    %v339 = vunpack.c.l.b16 %v92
    %v340 = vunpack.c.h.b16 %v92
    %v341 = vunpack.c.l.b16 %v93
    %v342 = vunpack.c.h.b16 %v93
    %v343 = vunpack.c.l.b16 %v94
    %v344 = vunpack.c.h.b16 %v94
    %v345 = vunpack.c.l.b16 %v95
    %v346 = vunpack.c.h.b16 %v95
    %v347 = vunpack.c.l.b16 %v96
    %v348 = vunpack.c.h.b16 %v96
    %v349 = vunpack.c.l.b16 %v97
    %v350 = vunpack.c.h.b16 %v97
    %v351 = vunpack.c.l.b16 %v98
    %v352 = vunpack.c.h.b16 %v98
    %v353 = vunpack.c.l.b16 %v99
    %v354 = vunpack.c.h.b16 %v99
    %v355 = vunpack.c.l.b16 %v100
    %v356 = vunpack.c.h.b16 %v100
    %v357 = vunpack.c.l.b16 %v101
    %v358 = vunpack.c.h.b16 %v101
    %v359 = vunpack.c.l.b16 %v102
    %v360 = vunpack.c.h.b16 %v102
    %v361 = vunpack.c.l.b16 %v103
    %v362 = vunpack.c.h.b16 %v103
    %v363 = vunpack.c.l.b16 %v104
    %v364 = vunpack.c.h.b16 %v104
    %v365 = vunpack.c.l.b16 %v105
    %v366 = vunpack.c.h.b16 %v105
    %v367 = vunpack.c.l.b16 %v106
    %v368 = vunpack.c.h.b16 %v106
    %v369 = vunpack.c.l.b16 %v107
    %v370 = vunpack.c.h.b16 %v107
    %v371 = vunpack.c.l.b16 %v108
    %v372 = vunpack.c.h.b16 %v108
    %v373 = vunpack.c.l.b16 %v109
    %v374 = vunpack.c.h.b16 %v109
    %v375 = vunpack.c.l.b16 %v110
    %v376 = vunpack.c.h.b16 %v110
    %v377 = vpack.c.b16 %v325, %v321
    %v378 = vpack.c.b16 %v326, %v322
    %v379 = vpack.c.b16 %v327, %v323
    %v380 = vpack.c.b16 %v328, %v324
    %v381 = vpack.c.b16 %v333, %v329
    %v382 = vpack.c.b16 %v334, %v330
    %v383 = vpack.c.b16 %v335, %v331
    %v384 = vpack.c.b16 %v336, %v332
    %v385 = vpack.c.b16 %v341, %v337
    %v386 = vpack.c.b16 %v342, %v338
    %v387 = vpack.c.b16 %v343, %v339
    %v388 = vpack.c.b16 %v344, %v340
    %v389 = vpack.c.b16 %v349, %v345
    %v390 = vpack.c.b16 %v350, %v346
    %v391 = vpack.c.b16 %v351, %v347
    %v392 = vpack.c.b16 %v352, %v348
    %v393 = vpack.c.b16 %v357, %v353
    %v394 = vpack.c.b16 %v358, %v354
    %v395 = vpack.c.b16 %v359, %v355
    %v396 = vpack.c.b16 %v360, %v356
    %v397 = vpack.c.b16 %v365, %v361
    %v398 = vpack.c.b16 %v366, %v362
    %v399 = vpack.c.b16 %v367, %v363
    %v400 = vpack.c.b16 %v368, %v364
    %v401 = vpack.c.b16 %v373, %v369
    %v402 = vpack.c.b16 %v374, %v370
    %v403 = vpack.c.b16 %v375, %v371
    %v404 = vpack.c.b16 %v376, %v372
    %vm433 = vcmask 916480
    %v435 = vsel %vm433, %v261, 0
    %v438 = vsel %vm433, %v262, 0
    %v441 = vsel %vm433, %v263, 0
    %v444 = vsel %vm433, %v264, 0
    %v447 = vsel %vm433, %v265, 0
    %v450 = vsel %vm433, %v266, 0
    %v453 = vsel %vm433, %v267, 0
    %v456 = vsel %vm433, %v268, 0
    %v459 = vsel %vm433, %v269, 0
    %v462 = vsel %vm433, %v270, 0
    %v465 = vsel %vm433, %v271, 0
    %v468 = vsel %vm433, %v272, 0
    %v471 = vsel %vm433, %v273, 0
    %v474 = vsel %vm433, %v274, 0
    %v477 = vsel %vm433, %v275, 0
    %v480 = vsel %vm433, %v276, 0
    %v483 = vsel %vm433, %v277, 0
    %v486 = vsel %vm433, %v278, 0
    %v489 = vsel %vm433, %v279, 0
    %v492 = vsel %vm433, %v280, 0
    %v495 = vsel %vm433, %v281, 0
    %v498 = vsel %vm433, %v282, 0
    %v501 = vsel %vm433, %v283, 0
    %v504 = vsel %vm433, %v284, 0
    %v507 = vsel %vm433, %v285, 0
    %v510 = vsel %vm433, %v286, 0
    %v513 = vsel %vm433, %v287, 0
    %v516 = vsel %vm433, %v288, 0
    %v519 = vsel %vm433, %v289, 0
    %v522 = vsel %vm433, %v290, 0
    %v525 = vsel %vm433, %v291, 0
    %v528 = vsel %vm433, %v292, 0
    %530 = vmatprep.subr.bf16.mxu0 %v378
    %531 = vmatpush1.bf16.msra.mxu0 %v377
    %532 = vmatprep.subr.bf16.mxu0 %v382
    %533 = vmatpush1.bf16.msra.mxu0 %v381
    %534 = vmatprep.subr.bf16.mxu0 %v386
    %535 = vmatpush1.bf16.msra.mxu0 %v385
    %536 = vmatprep.subr.bf16.mxu0 %v390
    %537 = vmatpush1.bf16.msra.mxu0 %v389
    %538 = vmatprep.subr.bf16.mxu0 %v394
    %539 = vmatpush1.bf16.msra.mxu0 %v393
    %540 = vmatprep.subr.bf16.mxu0 %v398
    %541 = vmatpush1.bf16.msra.mxu0 %v397
    %542 = vmatprep.subr.bf16.mxu0 %v402
    %543 = vmatpush1.bf16.msra.mxu0 %v401
    %544 = vmatprep.subr.bf16.mxu0 0
    %545 = vmatpush1.bf16.msra.mxu0 0
    %546 = vmatprep.subr.bf16.mxu0 0
    %547 = vmatpush1.bf16.msra.mxu0 0
    %548 = vmatprep.subr.bf16.mxu0 0
    %549 = vmatpush1.bf16.msra.mxu0 0
    %550 = vmatprep.subr.bf16.mxu0 0
    %551 = vmatpush1.bf16.msra.mxu0 0
    %552 = vmatprep.subr.bf16.mxu0 0
    %553 = vmatpush1.bf16.msra.mxu0 0
    %554 = vmatprep.subr.bf16.mxu0 0
    %555 = vmatpush1.bf16.msra.mxu0 0
    %556 = vmatprep.subr.bf16.mxu0 0
    %557 = vmatpush1.bf16.msra.mxu0 0
    %558 = vmatprep.subr.bf16.mxu0 0
    %559 = vmatpush1.bf16.msra.mxu0 0
    %560 = vmatprep.subr.bf16.mxu0 0
    %561 = vmatpush1.bf16.msra.mxu0 0
    %562 = vmatprep.mubr.bf16.mxu0 0
    %563 = vmatmul.mubr.bf16.gmra.mrb[0].mxu0 %v435
    %v564 = vpop.f32.mrb[0].mxu0
    %v565 = vadd.f32 %v116, %v564
    %v566 = vpop.f32.mrb[0].mxu0
    %v567 = vadd.f32 %v120, %v566
    %v568 = vpop.f32.mrb[0].mxu0
    %v569 = vadd.f32 %v116, %v568
    %v570 = vpop.f32.mrb[0].mxu0
    %v571 = vadd.f32 %v120, %v570
    %572 = vmatprep.mubr.bf16.mxu0 0
    %573 = vmatmul.mubr.bf16.gmra.mrb[0].mxu0 %v438
    %v574 = vpop.f32.mrb[0].mxu0
    %v575 = vadd.f32 %v116, %v574
    %v576 = vpop.f32.mrb[0].mxu0
    %v577 = vadd.f32 %v120, %v576
    %v578 = vpop.f32.mrb[0].mxu0
    %v579 = vadd.f32 %v116, %v578
    %v580 = vpop.f32.mrb[0].mxu0
    %v581 = vadd.f32 %v120, %v580
    %582 = vmatprep.mubr.bf16.mxu0 0
    %583 = vmatmul.mubr.bf16.gmra.mrb[0].mxu0 %v441
    %v584 = vpop.f32.mrb[0].mxu0
    %v585 = vadd.f32 %v116, %v584
    %v586 = vpop.f32.mrb[0].mxu0
    %v587 = vadd.f32 %v120, %v586
    %v588 = vpop.f32.mrb[0].mxu0
    %v589 = vadd.f32 %v116, %v588
    %v590 = vpop.f32.mrb[0].mxu0
    %v591 = vadd.f32 %v120, %v590
    %592 = vmatprep.mubr.bf16.mxu0 0
    %593 = vmatmul.mubr.bf16.gmra.mrb[0].mxu0 %v444
    %v594 = vpop.f32.mrb[0].mxu0
    %v595 = vadd.f32 %v116, %v594
    %v596 = vpop.f32.mrb[0].mxu0
    %v597 = vadd.f32 %v120, %v596
    %v598 = vpop.f32.mrb[0].mxu0
    %v599 = vadd.f32 %v116, %v598
    %v600 = vpop.f32.mrb[0].mxu0
    %v601 = vadd.f32 %v120, %v600
    %602 = vmatprep.mubr.bf16.mxu0 0
    %603 = vmatmul.mubr.bf16.gmra.mrb[0].mxu0 %v447
    %v604 = vpop.f32.mrb[0].mxu0
    %v605 = vadd.f32 %v116, %v604
    %v606 = vpop.f32.mrb[0].mxu0
    %v607 = vadd.f32 %v120, %v606
    %v608 = vpop.f32.mrb[0].mxu0
    %v609 = vadd.f32 %v116, %v608
    %v610 = vpop.f32.mrb[0].mxu0
    %v611 = vadd.f32 %v120, %v610
    %612 = vmatprep.mubr.bf16.mxu0 0
    %613 = vmatmul.mubr.bf16.gmra.mrb[0].mxu0 %v450
    %v614 = vpop.f32.mrb[0].mxu0
    %v615 = vadd.f32 %v116, %v614
    %v616 = vpop.f32.mrb[0].mxu0
    %v617 = vadd.f32 %v120, %v616
    %v618 = vpop.f32.mrb[0].mxu0
    %v619 = vadd.f32 %v116, %v618
    %v620 = vpop.f32.mrb[0].mxu0
    %v621 = vadd.f32 %v120, %v620
    %622 = vmatprep.mubr.bf16.mxu0 0
    %623 = vmatmul.mubr.bf16.gmra.mrb[0].mxu0 %v453
    %v624 = vpop.f32.mrb[0].mxu0
    %v625 = vadd.f32 %v116, %v624
    %v626 = vpop.f32.mrb[0].mxu0
    %v627 = vadd.f32 %v120, %v626
    %v628 = vpop.f32.mrb[0].mxu0
    %v629 = vadd.f32 %v116, %v628
    %v630 = vpop.f32.mrb[0].mxu0
    %v631 = vadd.f32 %v120, %v630
    %632 = vmatprep.mubr.bf16.mxu0 0
    %633 = vmatmul.mubr.bf16.gmra.mrb[0].mxu0 %v456
    %v634 = vpop.f32.mrb[0].mxu0
    %v635 = vadd.f32 %v116, %v634
    %v636 = vpop.f32.mrb[0].mxu0
    %v637 = vadd.f32 %v120, %v636
    %v638 = vpop.f32.mrb[0].mxu0
    %v639 = vadd.f32 %v116, %v638
    %v640 = vpop.f32.mrb[0].mxu0
    %v641 = vadd.f32 %v120, %v640
    %642 = vmatprep.mubr.bf16.mxu0 0
    %643 = vmatmul.mubr.bf16.gmra.mrb[0].mxu0 %v459
    %v644 = vpop.f32.mrb[0].mxu0
    %v645 = vadd.f32 %v116, %v644
    %v646 = vpop.f32.mrb[0].mxu0
    %v647 = vadd.f32 %v120, %v646
    %v648 = vpop.f32.mrb[0].mxu0
    %v649 = vadd.f32 %v116, %v648
    %v650 = vpop.f32.mrb[0].mxu0
    %v651 = vadd.f32 %v120, %v650
    %652 = vmatprep.mubr.bf16.mxu0 0
    %653 = vmatmul.mubr.bf16.gmra.mrb[0].mxu0 %v462
    %v654 = vpop.f32.mrb[0].mxu0
    %v655 = vadd.f32 %v116, %v654
    %v656 = vpop.f32.mrb[0].mxu0
    %v657 = vadd.f32 %v120, %v656
    %v658 = vpop.f32.mrb[0].mxu0
    %v659 = vadd.f32 %v116, %v658
    %v660 = vpop.f32.mrb[0].mxu0
    %v661 = vadd.f32 %v120, %v660
    %662 = vmatprep.mubr.bf16.mxu0 0
    %663 = vmatmul.mubr.bf16.gmra.mrb[0].mxu0 %v465
    %v664 = vpop.f32.mrb[0].mxu0
    %v665 = vadd.f32 %v116, %v664
    %v666 = vpop.f32.mrb[0].mxu0
    %v667 = vadd.f32 %v120, %v666
    %v668 = vpop.f32.mrb[0].mxu0
    %v669 = vadd.f32 %v116, %v668
    %v670 = vpop.f32.mrb[0].mxu0
    %v671 = vadd.f32 %v120, %v670
    %672 = vmatprep.mubr.bf16.mxu0 0
    %673 = vmatmul.mubr.bf16.gmra.mrb[0].mxu0 %v468
    %v674 = vpop.f32.mrb[0].mxu0
    %v675 = vadd.f32 %v116, %v674
    %v676 = vpop.f32.mrb[0].mxu0
    %v677 = vadd.f32 %v120, %v676
    %v678 = vpop.f32.mrb[0].mxu0
    %v679 = vadd.f32 %v116, %v678
    %v680 = vpop.f32.mrb[0].mxu0
    %v681 = vadd.f32 %v120, %v680
    %682 = vmatprep.mubr.bf16.mxu0 0
    %683 = vmatmul.mubr.bf16.gmra.mrb[0].mxu0 %v471
    %v684 = vpop.f32.mrb[0].mxu0
    %v685 = vadd.f32 %v116, %v684
    %v686 = vpop.f32.mrb[0].mxu0
    %v687 = vadd.f32 %v120, %v686
    %v688 = vpop.f32.mrb[0].mxu0
    %v689 = vadd.f32 %v116, %v688
    %v690 = vpop.f32.mrb[0].mxu0
    %v691 = vadd.f32 %v120, %v690
    %692 = vmatprep.mubr.bf16.mxu0 0
    %693 = vmatmul.mubr.bf16.gmra.mrb[0].mxu0 %v474
    %v694 = vpop.f32.mrb[0].mxu0
    %v695 = vadd.f32 %v116, %v694
    %v696 = vpop.f32.mrb[0].mxu0
    %v697 = vadd.f32 %v120, %v696
    %v698 = vpop.f32.mrb[0].mxu0
    %v699 = vadd.f32 %v116, %v698
    %v700 = vpop.f32.mrb[0].mxu0
    %v701 = vadd.f32 %v120, %v700
    %702 = vmatprep.mubr.bf16.mxu0 0
    %703 = vmatmul.mubr.bf16.gmra.mrb[0].mxu0 %v477
    %v704 = vpop.f32.mrb[0].mxu0
    %v705 = vadd.f32 %v116, %v704
    %v706 = vpop.f32.mrb[0].mxu0
    %v707 = vadd.f32 %v120, %v706
    %v708 = vpop.f32.mrb[0].mxu0
    %v709 = vadd.f32 %v116, %v708
    %v710 = vpop.f32.mrb[0].mxu0
    %v711 = vadd.f32 %v120, %v710
    %712 = vmatprep.mubr.bf16.mxu0 0
    %713 = vmatmul.mubr.bf16.gmra.mrb[0].mxu0 %v480
    %v714 = vpop.f32.mrb[0].mxu0
    %v715 = vadd.f32 %v116, %v714
    %v716 = vpop.f32.mrb[0].mxu0
    %v717 = vadd.f32 %v120, %v716
    %v718 = vpop.f32.mrb[0].mxu0
    %v719 = vadd.f32 %v116, %v718
    %v720 = vpop.f32.mrb[0].mxu0
    %v721 = vadd.f32 %v120, %v720
    %722 = vmatprep.mubr.bf16.mxu0 0
    %723 = vmatmul.mubr.bf16.gmra.mrb[0].mxu0 %v483
    %v724 = vpop.f32.mrb[0].mxu0
    %v725 = vadd.f32 %v116, %v724
    %v726 = vpop.f32.mrb[0].mxu0
    %v727 = vadd.f32 %v120, %v726
    %v728 = vpop.f32.mrb[0].mxu0
    %v729 = vadd.f32 %v116, %v728
    %v730 = vpop.f32.mrb[0].mxu0
    %v731 = vadd.f32 %v120, %v730
    %732 = vmatprep.mubr.bf16.mxu0 0
    %733 = vmatmul.mubr.bf16.gmra.mrb[0].mxu0 %v486
    %v734 = vpop.f32.mrb[0].mxu0
    %v735 = vadd.f32 %v116, %v734
    %v736 = vpop.f32.mrb[0].mxu0
    %v737 = vadd.f32 %v120, %v736
    %v738 = vpop.f32.mrb[0].mxu0
    %v739 = vadd.f32 %v116, %v738
    %v740 = vpop.f32.mrb[0].mxu0
    %v741 = vadd.f32 %v120, %v740
    %742 = vmatprep.mubr.bf16.mxu0 0
    %743 = vmatmul.mubr.bf16.gmra.mrb[0].mxu0 %v489
    %v744 = vpop.f32.mrb[0].mxu0
    %v745 = vadd.f32 %v116, %v744
    %v746 = vpop.f32.mrb[0].mxu0
    %v747 = vadd.f32 %v120, %v746
    %v748 = vpop.f32.mrb[0].mxu0
    %v749 = vadd.f32 %v116, %v748
    %v750 = vpop.f32.mrb[0].mxu0
    %v751 = vadd.f32 %v120, %v750
    %752 = vmatprep.mubr.bf16.mxu0 0
    %753 = vmatmul.mubr.bf16.gmra.mrb[0].mxu0 %v492
    %v754 = vpop.f32.mrb[0].mxu0
    %v755 = vadd.f32 %v116, %v754
    %v756 = vpop.f32.mrb[0].mxu0
    %v757 = vadd.f32 %v120, %v756
    %v758 = vpop.f32.mrb[0].mxu0
    %v759 = vadd.f32 %v116, %v758
    %v760 = vpop.f32.mrb[0].mxu0
    %v761 = vadd.f32 %v120, %v760
    %762 = vmatprep.mubr.bf16.mxu0 0
    %763 = vmatmul.mubr.bf16.gmra.mrb[0].mxu0 %v495
    %v764 = vpop.f32.mrb[0].mxu0
    %v765 = vadd.f32 %v116, %v764
    %v766 = vpop.f32.mrb[0].mxu0
    %v767 = vadd.f32 %v120, %v766
    %v768 = vpop.f32.mrb[0].mxu0
    %v769 = vadd.f32 %v116, %v768
    %v770 = vpop.f32.mrb[0].mxu0
    %v771 = vadd.f32 %v120, %v770
    %772 = vmatprep.mubr.bf16.mxu0 0
    %773 = vmatmul.mubr.bf16.gmra.mrb[0].mxu0 %v498
    %v774 = vpop.f32.mrb[0].mxu0
    %v775 = vadd.f32 %v116, %v774
    %v776 = vpop.f32.mrb[0].mxu0
    %v777 = vadd.f32 %v120, %v776
    %v778 = vpop.f32.mrb[0].mxu0
    %v779 = vadd.f32 %v116, %v778
    %v780 = vpop.f32.mrb[0].mxu0
    %v781 = vadd.f32 %v120, %v780
    %782 = vmatprep.mubr.bf16.mxu0 0
    %783 = vmatmul.mubr.bf16.gmra.mrb[0].mxu0 %v501
    %v784 = vpop.f32.mrb[0].mxu0
    %v785 = vadd.f32 %v116, %v784
    %v786 = vpop.f32.mrb[0].mxu0
    %v787 = vadd.f32 %v120, %v786
    %v788 = vpop.f32.mrb[0].mxu0
    %v789 = vadd.f32 %v116, %v788
    %v790 = vpop.f32.mrb[0].mxu0
    %v791 = vadd.f32 %v120, %v790
    %792 = vmatprep.mubr.bf16.mxu0 0
    %793 = vmatmul.mubr.bf16.gmra.mrb[0].mxu0 %v504
    %v794 = vpop.f32.mrb[0].mxu0
    %v795 = vadd.f32 %v116, %v794
    %v796 = vpop.f32.mrb[0].mxu0
    %v797 = vadd.f32 %v120, %v796
    %v798 = vpop.f32.mrb[0].mxu0
    %v799 = vadd.f32 %v116, %v798
    %v800 = vpop.f32.mrb[0].mxu0
    %v801 = vadd.f32 %v120, %v800
    %802 = vmatprep.mubr.bf16.mxu0 0
    %803 = vmatmul.mubr.bf16.gmra.mrb[0].mxu0 %v507
    %v804 = vpop.f32.mrb[0].mxu0
    %v805 = vadd.f32 %v116, %v804
    %v806 = vpop.f32.mrb[0].mxu0
    %v807 = vadd.f32 %v120, %v806
    %v808 = vpop.f32.mrb[0].mxu0
    %v809 = vadd.f32 %v116, %v808
    %v810 = vpop.f32.mrb[0].mxu0
    %v811 = vadd.f32 %v120, %v810
    %812 = vmatprep.mubr.bf16.mxu0 0
    %813 = vmatmul.mubr.bf16.gmra.mrb[0].mxu0 %v510
    %v814 = vpop.f32.mrb[0].mxu0
    %v815 = vadd.f32 %v116, %v814
    %v816 = vpop.f32.mrb[0].mxu0
    %v817 = vadd.f32 %v120, %v816
    %v818 = vpop.f32.mrb[0].mxu0
    %v819 = vadd.f32 %v116, %v818
    %v820 = vpop.f32.mrb[0].mxu0
    %v821 = vadd.f32 %v120, %v820
    %822 = vmatprep.mubr.bf16.mxu0 0
    %823 = vmatmul.mubr.bf16.gmra.mrb[0].mxu0 %v513
    %v824 = vpop.f32.mrb[0].mxu0
    %v825 = vadd.f32 %v116, %v824
    %v826 = vpop.f32.mrb[0].mxu0
    %v827 = vadd.f32 %v120, %v826
    %v828 = vpop.f32.mrb[0].mxu0
    %v829 = vadd.f32 %v116, %v828
    %v830 = vpop.f32.mrb[0].mxu0
    %v831 = vadd.f32 %v120, %v830
    %832 = vmatprep.mubr.bf16.mxu0 0
    %833 = vmatmul.mubr.bf16.gmra.mrb[0].mxu0 %v516
    %v834 = vpop.f32.mrb[0].mxu0
    %v835 = vadd.f32 %v116, %v834
    %v836 = vpop.f32.mrb[0].mxu0
    %v837 = vadd.f32 %v120, %v836
    %v838 = vpop.f32.mrb[0].mxu0
    %v839 = vadd.f32 %v116, %v838
    %v840 = vpop.f32.mrb[0].mxu0
    %v841 = vadd.f32 %v120, %v840
    %842 = vmatprep.mubr.bf16.mxu0 0
    %843 = vmatmul.mubr.bf16.gmra.mrb[0].mxu0 %v519
    %v844 = vpop.f32.mrb[0].mxu0
    %v845 = vadd.f32 %v116, %v844
    %v846 = vpop.f32.mrb[0].mxu0
    %v847 = vadd.f32 %v120, %v846
    %v848 = vpop.f32.mrb[0].mxu0
    %v849 = vadd.f32 %v116, %v848
    %v850 = vpop.f32.mrb[0].mxu0
    %v851 = vadd.f32 %v120, %v850
    %852 = vmatprep.mubr.bf16.mxu0 0
    %853 = vmatmul.mubr.bf16.gmra.mrb[0].mxu0 %v522
    %v854 = vpop.f32.mrb[0].mxu0
    %v855 = vadd.f32 %v116, %v854
    %v856 = vpop.f32.mrb[0].mxu0
    %v857 = vadd.f32 %v120, %v856
    %v858 = vpop.f32.mrb[0].mxu0
    %v859 = vadd.f32 %v116, %v858
    %v860 = vpop.f32.mrb[0].mxu0
    %v861 = vadd.f32 %v120, %v860
    %862 = vmatprep.mubr.bf16.mxu0 0
    %863 = vmatmul.mubr.bf16.gmra.mrb[0].mxu0 %v525
    %v864 = vpop.f32.mrb[0].mxu0
    %v865 = vadd.f32 %v116, %v864
    %v866 = vpop.f32.mrb[0].mxu0
    %v867 = vadd.f32 %v120, %v866
    %v868 = vpop.f32.mrb[0].mxu0
    %v869 = vadd.f32 %v116, %v868
    %v870 = vpop.f32.mrb[0].mxu0
    %v871 = vadd.f32 %v120, %v870
    %872 = vmatprep.mubr.bf16.mxu0 0
    %873 = vmatmul.mubr.bf16.gmra.mrb[0].mxu0 %v528
    %v874 = vpop.f32.mrb[0].mxu0
    %v875 = vadd.f32 %v116, %v874
    %v876 = vpop.f32.mrb[0].mxu0
    %v877 = vadd.f32 %v120, %v876
    %v878 = vpop.f32.mrb[0].mxu0
    %v879 = vadd.f32 %v116, %v878
    %v880 = vpop.f32.mrb[0].mxu0
    %v881 = vadd.f32 %v120, %v880
    %882 = vdwg.mxu0
    %883 = vmatprep.subr.bf16.mxu0 %v380
    %884 = vmatpush1.bf16.msra.mxu0 %v379
    %885 = vmatprep.subr.bf16.mxu0 %v384
    %886 = vmatpush1.bf16.msra.mxu0 %v383
    %887 = vmatprep.subr.bf16.mxu0 %v388
    %888 = vmatpush1.bf16.msra.mxu0 %v387
    %889 = vmatprep.subr.bf16.mxu0 %v392
    %890 = vmatpush1.bf16.msra.mxu0 %v391
    %891 = vmatprep.subr.bf16.mxu0 %v396
    %892 = vmatpush1.bf16.msra.mxu0 %v395
    %893 = vmatprep.subr.bf16.mxu0 %v400
    %894 = vmatpush1.bf16.msra.mxu0 %v399
    %895 = vmatprep.subr.bf16.mxu0 %v404
    %896 = vmatpush1.bf16.msra.mxu0 %v403
    %897 = vmatprep.subr.bf16.mxu0 0
    %898 = vmatpush1.bf16.msra.mxu0 0
    %899 = vmatprep.subr.bf16.mxu0 0
    %900 = vmatpush1.bf16.msra.mxu0 0
    %901 = vmatprep.subr.bf16.mxu0 0
    %902 = vmatpush1.bf16.msra.mxu0 0
    %903 = vmatprep.subr.bf16.mxu0 0
    %904 = vmatpush1.bf16.msra.mxu0 0
    %905 = vmatprep.subr.bf16.mxu0 0
    %906 = vmatpush1.bf16.msra.mxu0 0
    %907 = vmatprep.subr.bf16.mxu0 0
    %908 = vmatpush1.bf16.msra.mxu0 0
    %909 = vmatprep.subr.bf16.mxu0 0
    %910 = vmatpush1.bf16.msra.mxu0 0
    %911 = vmatprep.subr.bf16.mxu0 0
    %912 = vmatpush1.bf16.msra.mxu0 0
    %913 = vmatprep.subr.bf16.mxu0 0
    %914 = vmatpush1.bf16.msra.mxu0 0
    %915 = vmatprep.mubr.bf16.mxu0 0
    %916 = vmatmul.mubr.bf16.gmra.mrb[0].mxu0 %v435
    %v917 = vpop.f32.mrb[0].mxu0
    %v918 = vadd.f32 %v124, %v917
    %v919 = vpop.f32.mrb[0].mxu0
    %v920 = vadd.f32 %v128, %v919
    %v921 = vpop.f32.mrb[0].mxu0
    %v922 = vadd.f32 %v124, %v921
    %v923 = vpop.f32.mrb[0].mxu0
    %v924 = vadd.f32 %v128, %v923
    %925 = vmatprep.mubr.bf16.mxu0 0
    %926 = vmatmul.mubr.bf16.gmra.mrb[0].mxu0 %v438
    %v927 = vpop.f32.mrb[0].mxu0
    %v928 = vadd.f32 %v124, %v927
    %v929 = vpop.f32.mrb[0].mxu0
    %v930 = vadd.f32 %v128, %v929
    %v931 = vpop.f32.mrb[0].mxu0
    %v932 = vadd.f32 %v124, %v931
    %v933 = vpop.f32.mrb[0].mxu0
    %v934 = vadd.f32 %v128, %v933
    %935 = vmatprep.mubr.bf16.mxu0 0
    %936 = vmatmul.mubr.bf16.gmra.mrb[0].mxu0 %v441
    %v937 = vpop.f32.mrb[0].mxu0
    %v938 = vadd.f32 %v124, %v937
    %v939 = vpop.f32.mrb[0].mxu0
    %v940 = vadd.f32 %v128, %v939
    %v941 = vpop.f32.mrb[0].mxu0
    %v942 = vadd.f32 %v124, %v941
    %v943 = vpop.f32.mrb[0].mxu0
    %v944 = vadd.f32 %v128, %v943
    %945 = vmatprep.mubr.bf16.mxu0 0
    %946 = vmatmul.mubr.bf16.gmra.mrb[0].mxu0 %v444
    %v947 = vpop.f32.mrb[0].mxu0
    %v948 = vadd.f32 %v124, %v947
    %v949 = vpop.f32.mrb[0].mxu0
    %v950 = vadd.f32 %v128, %v949
    %v951 = vpop.f32.mrb[0].mxu0
    %v952 = vadd.f32 %v124, %v951
    %v953 = vpop.f32.mrb[0].mxu0
    %v954 = vadd.f32 %v128, %v953
    %955 = vmatprep.mubr.bf16.mxu0 0
    %956 = vmatmul.mubr.bf16.gmra.mrb[0].mxu0 %v447
    %v957 = vpop.f32.mrb[0].mxu0
    %v958 = vadd.f32 %v124, %v957
    %v959 = vpop.f32.mrb[0].mxu0
    %v960 = vadd.f32 %v128, %v959
    %v961 = vpop.f32.mrb[0].mxu0
    %v962 = vadd.f32 %v124, %v961
    %v963 = vpop.f32.mrb[0].mxu0
    %v964 = vadd.f32 %v128, %v963
    %965 = vmatprep.mubr.bf16.mxu0 0
    %966 = vmatmul.mubr.bf16.gmra.mrb[0].mxu0 %v450
    %v967 = vpop.f32.mrb[0].mxu0
    %v968 = vadd.f32 %v124, %v967
    %v969 = vpop.f32.mrb[0].mxu0
    %v970 = vadd.f32 %v128, %v969
    %v971 = vpop.f32.mrb[0].mxu0
    %v972 = vadd.f32 %v124, %v971
    %v973 = vpop.f32.mrb[0].mxu0
    %v974 = vadd.f32 %v128, %v973
    %975 = vmatprep.mubr.bf16.mxu0 0
    %976 = vmatmul.mubr.bf16.gmra.mrb[0].mxu0 %v453
    %v977 = vpop.f32.mrb[0].mxu0
    %v978 = vadd.f32 %v124, %v977
    %v979 = vpop.f32.mrb[0].mxu0
    %v980 = vadd.f32 %v128, %v979
    %v981 = vpop.f32.mrb[0].mxu0
    %v982 = vadd.f32 %v124, %v981
    %v983 = vpop.f32.mrb[0].mxu0
    %v984 = vadd.f32 %v128, %v983
    %985 = vmatprep.mubr.bf16.mxu0 0
    %986 = vmatmul.mubr.bf16.gmra.mrb[0].mxu0 %v456
    %v987 = vpop.f32.mrb[0].mxu0
    %v988 = vadd.f32 %v124, %v987
    %v989 = vpop.f32.mrb[0].mxu0
    %v990 = vadd.f32 %v128, %v989
    %v991 = vpop.f32.mrb[0].mxu0
    %v992 = vadd.f32 %v124, %v991
    %v993 = vpop.f32.mrb[0].mxu0
    %v994 = vadd.f32 %v128, %v993
    %995 = vmatprep.mubr.bf16.mxu0 0
    %996 = vmatmul.mubr.bf16.gmra.mrb[0].mxu0 %v459
    %v997 = vpop.f32.mrb[0].mxu0
    %v998 = vadd.f32 %v124, %v997
    %v999 = vpop.f32.mrb[0].mxu0
    %v1000 = vadd.f32 %v128, %v999
    %v1001 = vpop.f32.mrb[0].mxu0
    %v1002 = vadd.f32 %v124, %v1001
    %v1003 = vpop.f32.mrb[0].mxu0
    %v1004 = vadd.f32 %v128, %v1003
    %1005 = vmatprep.mubr.bf16.mxu0 0
    %1006 = vmatmul.mubr.bf16.gmra.mrb[0].mxu0 %v462
    %v1007 = vpop.f32.mrb[0].mxu0
    %v1008 = vadd.f32 %v124, %v1007
    %v1009 = vpop.f32.mrb[0].mxu0
    %v1010 = vadd.f32 %v128, %v1009
    %v1011 = vpop.f32.mrb[0].mxu0
    %v1012 = vadd.f32 %v124, %v1011
    %v1013 = vpop.f32.mrb[0].mxu0
    %v1014 = vadd.f32 %v128, %v1013
    %1015 = vmatprep.mubr.bf16.mxu0 0
    %1016 = vmatmul.mubr.bf16.gmra.mrb[0].mxu0 %v465
    %v1017 = vpop.f32.mrb[0].mxu0
    %v1018 = vadd.f32 %v124, %v1017
    %v1019 = vpop.f32.mrb[0].mxu0
    %v1020 = vadd.f32 %v128, %v1019
    %v1021 = vpop.f32.mrb[0].mxu0
    %v1022 = vadd.f32 %v124, %v1021
    %v1023 = vpop.f32.mrb[0].mxu0
    %v1024 = vadd.f32 %v128, %v1023
    %1025 = vmatprep.mubr.bf16.mxu0 0
    %1026 = vmatmul.mubr.bf16.gmra.mrb[0].mxu0 %v468
    %v1027 = vpop.f32.mrb[0].mxu0
    %v1028 = vadd.f32 %v124, %v1027
    %v1029 = vpop.f32.mrb[0].mxu0
    %v1030 = vadd.f32 %v128, %v1029
    %v1031 = vpop.f32.mrb[0].mxu0
    %v1032 = vadd.f32 %v124, %v1031
    %v1033 = vpop.f32.mrb[0].mxu0
    %v1034 = vadd.f32 %v128, %v1033
    %1035 = vmatprep.mubr.bf16.mxu0 0
    %1036 = vmatmul.mubr.bf16.gmra.mrb[0].mxu0 %v471
    %v1037 = vpop.f32.mrb[0].mxu0
    %v1038 = vadd.f32 %v124, %v1037
    %v1039 = vpop.f32.mrb[0].mxu0
    %v1040 = vadd.f32 %v128, %v1039
    %v1041 = vpop.f32.mrb[0].mxu0
    %v1042 = vadd.f32 %v124, %v1041
    %v1043 = vpop.f32.mrb[0].mxu0
    %v1044 = vadd.f32 %v128, %v1043
    %1045 = vmatprep.mubr.bf16.mxu0 0
    %1046 = vmatmul.mubr.bf16.gmra.mrb[0].mxu0 %v474
    %v1047 = vpop.f32.mrb[0].mxu0
    %v1048 = vadd.f32 %v124, %v1047
    %v1049 = vpop.f32.mrb[0].mxu0
    %v1050 = vadd.f32 %v128, %v1049
    %v1051 = vpop.f32.mrb[0].mxu0
    %v1052 = vadd.f32 %v124, %v1051
    %v1053 = vpop.f32.mrb[0].mxu0
    %v1054 = vadd.f32 %v128, %v1053
    %1055 = vmatprep.mubr.bf16.mxu0 0
    %1056 = vmatmul.mubr.bf16.gmra.mrb[0].mxu0 %v477
    %v1057 = vpop.f32.mrb[0].mxu0
    %v1058 = vadd.f32 %v124, %v1057
    %v1059 = vpop.f32.mrb[0].mxu0
    %v1060 = vadd.f32 %v128, %v1059
    %v1061 = vpop.f32.mrb[0].mxu0
    %v1062 = vadd.f32 %v124, %v1061
    %v1063 = vpop.f32.mrb[0].mxu0
    %v1064 = vadd.f32 %v128, %v1063
    %1065 = vmatprep.mubr.bf16.mxu0 0
    %1066 = vmatmul.mubr.bf16.gmra.mrb[0].mxu0 %v480
    %v1067 = vpop.f32.mrb[0].mxu0
    %v1068 = vadd.f32 %v124, %v1067
    %v1069 = vpop.f32.mrb[0].mxu0
    %v1070 = vadd.f32 %v128, %v1069
    %v1071 = vpop.f32.mrb[0].mxu0
    %v1072 = vadd.f32 %v124, %v1071
    %v1073 = vpop.f32.mrb[0].mxu0
    %v1074 = vadd.f32 %v128, %v1073
    %1075 = vmatprep.mubr.bf16.mxu0 0
    %1076 = vmatmul.mubr.bf16.gmra.mrb[0].mxu0 %v483
    %v1077 = vpop.f32.mrb[0].mxu0
    %v1078 = vadd.f32 %v124, %v1077
    %v1079 = vpop.f32.mrb[0].mxu0
    %v1080 = vadd.f32 %v128, %v1079
    %v1081 = vpop.f32.mrb[0].mxu0
    %v1082 = vadd.f32 %v124, %v1081
    %v1083 = vpop.f32.mrb[0].mxu0
    %v1084 = vadd.f32 %v128, %v1083
    %1085 = vmatprep.mubr.bf16.mxu0 0
    %1086 = vmatmul.mubr.bf16.gmra.mrb[0].mxu0 %v486
    %v1087 = vpop.f32.mrb[0].mxu0
    %v1088 = vadd.f32 %v124, %v1087
    %v1089 = vpop.f32.mrb[0].mxu0
    %v1090 = vadd.f32 %v128, %v1089
    %v1091 = vpop.f32.mrb[0].mxu0
    %v1092 = vadd.f32 %v124, %v1091
    %v1093 = vpop.f32.mrb[0].mxu0
    %v1094 = vadd.f32 %v128, %v1093
    %1095 = vmatprep.mubr.bf16.mxu0 0
    %1096 = vmatmul.mubr.bf16.gmra.mrb[0].mxu0 %v489
    %v1097 = vpop.f32.mrb[0].mxu0
    %v1098 = vadd.f32 %v124, %v1097
    %v1099 = vpop.f32.mrb[0].mxu0
    %v1100 = vadd.f32 %v128, %v1099
    %v1101 = vpop.f32.mrb[0].mxu0
    %v1102 = vadd.f32 %v124, %v1101
    %v1103 = vpop.f32.mrb[0].mxu0
    %v1104 = vadd.f32 %v128, %v1103
    %1105 = vmatprep.mubr.bf16.mxu0 0
    %1106 = vmatmul.mubr.bf16.gmra.mrb[0].mxu0 %v492
    %v1107 = vpop.f32.mrb[0].mxu0
    %v1108 = vadd.f32 %v124, %v1107
    %v1109 = vpop.f32.mrb[0].mxu0
    %v1110 = vadd.f32 %v128, %v1109
    %v1111 = vpop.f32.mrb[0].mxu0
    %v1112 = vadd.f32 %v124, %v1111
    %v1113 = vpop.f32.mrb[0].mxu0
    %v1114 = vadd.f32 %v128, %v1113
    %1115 = vmatprep.mubr.bf16.mxu0 0
    %1116 = vmatmul.mubr.bf16.gmra.mrb[0].mxu0 %v495
    %v1117 = vpop.f32.mrb[0].mxu0
    %v1118 = vadd.f32 %v124, %v1117
    %v1119 = vpop.f32.mrb[0].mxu0
    %v1120 = vadd.f32 %v128, %v1119
    %v1121 = vpop.f32.mrb[0].mxu0
    %v1122 = vadd.f32 %v124, %v1121
    %v1123 = vpop.f32.mrb[0].mxu0
    %v1124 = vadd.f32 %v128, %v1123
    %1125 = vmatprep.mubr.bf16.mxu0 0
    %1126 = vmatmul.mubr.bf16.gmra.mrb[0].mxu0 %v498
    %v1127 = vpop.f32.mrb[0].mxu0
    %v1128 = vadd.f32 %v124, %v1127
    %v1129 = vpop.f32.mrb[0].mxu0
    %v1130 = vadd.f32 %v128, %v1129
    %v1131 = vpop.f32.mrb[0].mxu0
    %v1132 = vadd.f32 %v124, %v1131
    %v1133 = vpop.f32.mrb[0].mxu0
    %v1134 = vadd.f32 %v128, %v1133
    %1135 = vmatprep.mubr.bf16.mxu0 0
    %1136 = vmatmul.mubr.bf16.gmra.mrb[0].mxu0 %v501
    %v1137 = vpop.f32.mrb[0].mxu0
    %v1138 = vadd.f32 %v124, %v1137
    %v1139 = vpop.f32.mrb[0].mxu0
    %v1140 = vadd.f32 %v128, %v1139
    %v1141 = vpop.f32.mrb[0].mxu0
    %v1142 = vadd.f32 %v124, %v1141
    %v1143 = vpop.f32.mrb[0].mxu0
    %v1144 = vadd.f32 %v128, %v1143
    %1145 = vmatprep.mubr.bf16.mxu0 0
    %1146 = vmatmul.mubr.bf16.gmra.mrb[0].mxu0 %v504
    %v1147 = vpop.f32.mrb[0].mxu0
    %v1148 = vadd.f32 %v124, %v1147
    %v1149 = vpop.f32.mrb[0].mxu0
    %v1150 = vadd.f32 %v128, %v1149
    %v1151 = vpop.f32.mrb[0].mxu0
    %v1152 = vadd.f32 %v124, %v1151
    %v1153 = vpop.f32.mrb[0].mxu0
    %v1154 = vadd.f32 %v128, %v1153
    %1155 = vmatprep.mubr.bf16.mxu0 0
    %1156 = vmatmul.mubr.bf16.gmra.mrb[0].mxu0 %v507
    %v1157 = vpop.f32.mrb[0].mxu0
    %v1158 = vadd.f32 %v124, %v1157
    %v1159 = vpop.f32.mrb[0].mxu0
    %v1160 = vadd.f32 %v128, %v1159
    %v1161 = vpop.f32.mrb[0].mxu0
    %v1162 = vadd.f32 %v124, %v1161
    %v1163 = vpop.f32.mrb[0].mxu0
    %v1164 = vadd.f32 %v128, %v1163
    %1165 = vmatprep.mubr.bf16.mxu0 0
    %1166 = vmatmul.mubr.bf16.gmra.mrb[0].mxu0 %v510
    %v1167 = vpop.f32.mrb[0].mxu0
    %v1168 = vadd.f32 %v124, %v1167
    %v1169 = vpop.f32.mrb[0].mxu0
    %v1170 = vadd.f32 %v128, %v1169
    %v1171 = vpop.f32.mrb[0].mxu0
    %v1172 = vadd.f32 %v124, %v1171
    %v1173 = vpop.f32.mrb[0].mxu0
    %v1174 = vadd.f32 %v128, %v1173
    %1175 = vmatprep.mubr.bf16.mxu0 0
    %1176 = vmatmul.mubr.bf16.gmra.mrb[0].mxu0 %v513
    %v1177 = vpop.f32.mrb[0].mxu0
    %v1178 = vadd.f32 %v124, %v1177
    %v1179 = vpop.f32.mrb[0].mxu0
    %v1180 = vadd.f32 %v128, %v1179
    %v1181 = vpop.f32.mrb[0].mxu0
    %v1182 = vadd.f32 %v124, %v1181
    %v1183 = vpop.f32.mrb[0].mxu0
    %v1184 = vadd.f32 %v128, %v1183
    %1185 = vmatprep.mubr.bf16.mxu0 0
    %1186 = vmatmul.mubr.bf16.gmra.mrb[0].mxu0 %v516
    %v1187 = vpop.f32.mrb[0].mxu0
    %v1188 = vadd.f32 %v124, %v1187
    %v1189 = vpop.f32.mrb[0].mxu0
    %v1190 = vadd.f32 %v128, %v1189
    %v1191 = vpop.f32.mrb[0].mxu0
    %v1192 = vadd.f32 %v124, %v1191
    %v1193 = vpop.f32.mrb[0].mxu0
    %v1194 = vadd.f32 %v128, %v1193
    %1195 = vmatprep.mubr.bf16.mxu0 0
    %1196 = vmatmul.mubr.bf16.gmra.mrb[0].mxu0 %v519
    %v1197 = vpop.f32.mrb[0].mxu0
    %v1198 = vadd.f32 %v124, %v1197
    %v1199 = vpop.f32.mrb[0].mxu0
    %v1200 = vadd.f32 %v128, %v1199
    %v1201 = vpop.f32.mrb[0].mxu0
    %v1202 = vadd.f32 %v124, %v1201
    %v1203 = vpop.f32.mrb[0].mxu0
    %v1204 = vadd.f32 %v128, %v1203
    %1205 = vmatprep.mubr.bf16.mxu0 0
    %1206 = vmatmul.mubr.bf16.gmra.mrb[0].mxu0 %v522
    %v1207 = vpop.f32.mrb[0].mxu0
    %v1208 = vadd.f32 %v124, %v1207
    %v1209 = vpop.f32.mrb[0].mxu0
    %v1210 = vadd.f32 %v128, %v1209
    %v1211 = vpop.f32.mrb[0].mxu0
    %v1212 = vadd.f32 %v124, %v1211
    %v1213 = vpop.f32.mrb[0].mxu0
    %v1214 = vadd.f32 %v128, %v1213
    %1215 = vmatprep.mubr.bf16.mxu0 0
    %1216 = vmatmul.mubr.bf16.gmra.mrb[0].mxu0 %v525
    %v1217 = vpop.f32.mrb[0].mxu0
    %v1218 = vadd.f32 %v124, %v1217
    %v1219 = vpop.f32.mrb[0].mxu0
    %v1220 = vadd.f32 %v128, %v1219
    %v1221 = vpop.f32.mrb[0].mxu0
    %v1222 = vadd.f32 %v124, %v1221
    %v1223 = vpop.f32.mrb[0].mxu0
    %v1224 = vadd.f32 %v128, %v1223
    %1225 = vmatprep.mubr.bf16.mxu0 0
    %1226 = vmatmul.mubr.bf16.gmra.mrb[0].mxu0 %v528
    %v1227 = vpop.f32.mrb[0].mxu0
    %v1228 = vadd.f32 %v124, %v1227
    %v1229 = vpop.f32.mrb[0].mxu0
    %v1230 = vadd.f32 %v128, %v1229
    %v1231 = vpop.f32.mrb[0].mxu0
    %v1232 = vadd.f32 %v124, %v1231
    %v1233 = vpop.f32.mrb[0].mxu0
    %v1234 = vadd.f32 %v128, %v1233
    %1235 = vdwg.mxu0
    %1236 = vst [vmem:[#allocation2] sm:$0xff] %v565
    %1237 = vst [vmem:[#allocation2 + $0x8] sm:$0xff] %v569
    %1238 = vst [vmem:[#allocation2 + $0x10] sm:$0xff] %v575
    %1239 = vst [vmem:[#allocation2 + $0x18] sm:$0xff] %v579
    %1240 = vst [vmem:[#allocation2 + $0x20] sm:$0xff] %v585
    %1241 = vst [vmem:[#allocation2 + $0x28] sm:$0xff] %v589
    %1242 = vst [vmem:[#allocation2 + $0x30] sm:$0xff] %v595
    %1243 = vst [vmem:[#allocation2 + $0x38] sm:$0xff] %v599
    %1244 = vst [vmem:[#allocation2 + $0x40] sm:$0xff] %v605
    %1245 = vst [vmem:[#allocation2 + $0x48] sm:$0xff] %v609
    %1246 = vst [vmem:[#allocation2 + $0x50] sm:$0xff] %v615
    %1247 = vst [vmem:[#allocation2 + $0x58] sm:$0xff] %v619
    %1248 = vst [vmem:[#allocation2 + $0x60] sm:$0xff] %v625
    %1249 = vst [vmem:[#allocation2 + $0x68] sm:$0xff] %v629
    %1250 = vst [vmem:[#allocation2 + $0x70] sm:$0xff] %v635
    %1251 = vst [vmem:[#allocation2 + $0x78] sm:$0xff] %v639
    %1252 = vst [vmem:[#allocation2 + $0x80] sm:$0xff] %v645
    %1253 = vst [vmem:[#allocation2 + $0x88] sm:$0xff] %v649
    %1254 = vst [vmem:[#allocation2 + $0x90] sm:$0xff] %v655
    %1255 = vst [vmem:[#allocation2 + $0x98] sm:$0xff] %v659
    %1256 = vst [vmem:[#allocation2 + $0xa0] sm:$0xff] %v665
    %1257 = vst [vmem:[#allocation2 + $0xa8] sm:$0xff] %v669
    %1258 = vst [vmem:[#allocation2 + $0xb0] sm:$0xff] %v675
    %1259 = vst [vmem:[#allocation2 + $0xb8] sm:$0xff] %v679
    %1260 = vst [vmem:[#allocation2 + $0xc0] sm:$0xff] %v685
    %1261 = vst [vmem:[#allocation2 + $0xc8] sm:$0xff] %v689
    %1262 = vst [vmem:[#allocation2 + $0xd0] sm:$0xff] %v695
    %1263 = vst [vmem:[#allocation2 + $0xd8] sm:$0xff] %v699
    %1264 = vst [vmem:[#allocation2 + $0xe0] sm:$0xff] %v705
    %1265 = vst [vmem:[#allocation2 + $0xe8] sm:$0xff] %v709
    %1266 = vst [vmem:[#allocation2 + $0xf0] sm:$0xff] %v715
    %1267 = vst [vmem:[#allocation2 + $0xf8] sm:$0xff] %v719
    %1268 = vst [vmem:[#allocation2 + $0x100] sm:$0xff] %v725
    %1269 = vst [vmem:[#allocation2 + $0x108] sm:$0xff] %v729
    %1270 = vst [vmem:[#allocation2 + $0x110] sm:$0xff] %v735
    %1271 = vst [vmem:[#allocation2 + $0x118] sm:$0xff] %v739
    %1272 = vst [vmem:[#allocation2 + $0x120] sm:$0xff] %v745
    %1273 = vst [vmem:[#allocation2 + $0x128] sm:$0xff] %v749
    %1274 = vst [vmem:[#allocation2 + $0x130] sm:$0xff] %v755
    %1275 = vst [vmem:[#allocation2 + $0x138] sm:$0xff] %v759
    %1276 = vst [vmem:[#allocation2 + $0x140] sm:$0xff] %v765
    %1277 = vst [vmem:[#allocation2 + $0x148] sm:$0xff] %v769
    %1278 = vst [vmem:[#allocation2 + $0x150] sm:$0xff] %v775
    %1279 = vst [vmem:[#allocation2 + $0x158] sm:$0xff] %v779
    %1280 = vst [vmem:[#allocation2 + $0x160] sm:$0xff] %v785
    %1281 = vst [vmem:[#allocation2 + $0x168] sm:$0xff] %v789
    %1282 = vst [vmem:[#allocation2 + $0x170] sm:$0xff] %v795
    %1283 = vst [vmem:[#allocation2 + $0x178] sm:$0xff] %v799
    %1284 = vst [vmem:[#allocation2 + $0x180] sm:$0xff] %v805
    %1285 = vst [vmem:[#allocation2 + $0x188] sm:$0xff] %v809
    %1286 = vst [vmem:[#allocation2 + $0x190] sm:$0xff] %v815
    %1287 = vst [vmem:[#allocation2 + $0x198] sm:$0xff] %v819
    %1288 = vst [vmem:[#allocation2 + $0x1a0] sm:$0xff] %v825
    %1289 = vst [vmem:[#allocation2 + $0x1a8] sm:$0xff] %v829
    %1290 = vst [vmem:[#allocation2 + $0x1b0] sm:$0xff] %v835
    %1291 = vst [vmem:[#allocation2 + $0x1b8] sm:$0xff] %v839
    %1292 = vst [vmem:[#allocation2 + $0x1c0] sm:$0xff] %v845
    %1293 = vst [vmem:[#allocation2 + $0x1c8] sm:$0xff] %v849
    %1294 = vst [vmem:[#allocation2 + $0x1d0] sm:$0xff] %v855
    %1295 = vst [vmem:[#allocation2 + $0x1d8] sm:$0xff] %v859
    %1296 = vst [vmem:[#allocation2 + $0x1e0] sm:$0xff] %v865
    %1297 = vst [vmem:[#allocation2 + $0x1e8] sm:$0xff] %v869
    %1298 = vst [vmem:[#allocation2 + $0x1f0] sm:$0xff] %v875
    %1299 = vst [vmem:[#allocation2 + $0x1f8] sm:$0xff] %v879
    %1300 = vst [vmem:[#allocation4] sm:$0xff] %v567
    %1301 = vst [vmem:[#allocation4 + $0x8] sm:$0xff] %v918
    %1302 = vst [vmem:[#allocation4 + $0x10] sm:$0xff] %v920
    %1303 = vst [vmem:[#allocation4 + $0x18] sm:$0xff] %v571
    %1304 = vst [vmem:[#allocation4 + $0x20] sm:$0xff] %v922
    %1305 = vst [vmem:[#allocation4 + $0x28] sm:$0xff] %v924
    %1306 = vst [vmem:[#allocation4 + $0x30] sm:$0xff] %v577
    %1307 = vst [vmem:[#allocation4 + $0x38] sm:$0xff] %v928
    %1308 = vst [vmem:[#allocation4 + $0x40] sm:$0xff] %v930
    %1309 = vst [vmem:[#allocation4 + $0x48] sm:$0xff] %v581
    %1310 = vst [vmem:[#allocation4 + $0x50] sm:$0xff] %v932
    %1311 = vst [vmem:[#allocation4 + $0x58] sm:$0xff] %v934
    %1312 = vst [vmem:[#allocation4 + $0x60] sm:$0xff] %v587
    %1313 = vst [vmem:[#allocation4 + $0x68] sm:$0xff] %v938
    %1314 = vst [vmem:[#allocation4 + $0x70] sm:$0xff] %v940
    %1315 = vst [vmem:[#allocation4 + $0x78] sm:$0xff] %v591
    %1316 = vst [vmem:[#allocation4 + $0x80] sm:$0xff] %v942
    %1317 = vst [vmem:[#allocation4 + $0x88] sm:$0xff] %v944
    %1318 = vst [vmem:[#allocation4 + $0x90] sm:$0xff] %v597
    %1319 = vst [vmem:[#allocation4 + $0x98] sm:$0xff] %v948
    %1320 = vst [vmem:[#allocation4 + $0xa0] sm:$0xff] %v950
    %1321 = vst [vmem:[#allocation4 + $0xa8] sm:$0xff] %v601
    %1322 = vst [vmem:[#allocation4 + $0xb0] sm:$0xff] %v952
    %1323 = vst [vmem:[#allocation4 + $0xb8] sm:$0xff] %v954
    %1324 = vst [vmem:[#allocation4 + $0xc0] sm:$0xff] %v607
    %1325 = vst [vmem:[#allocation4 + $0xc8] sm:$0xff] %v958
    %1326 = vst [vmem:[#allocation4 + $0xd0] sm:$0xff] %v960
    %1327 = vst [vmem:[#allocation4 + $0xd8] sm:$0xff] %v611
    %1328 = vst [vmem:[#allocation4 + $0xe0] sm:$0xff] %v962
    %1329 = vst [vmem:[#allocation4 + $0xe8] sm:$0xff] %v964
    %1330 = vst [vmem:[#allocation4 + $0xf0] sm:$0xff] %v617
    %1331 = vst [vmem:[#allocation4 + $0xf8] sm:$0xff] %v968
    %1332 = vst [vmem:[#allocation4 + $0x100] sm:$0xff] %v970
    %1333 = vst [vmem:[#allocation4 + $0x108] sm:$0xff] %v621
    %1334 = vst [vmem:[#allocation4 + $0x110] sm:$0xff] %v972
    %1335 = vst [vmem:[#allocation4 + $0x118] sm:$0xff] %v974
    %1336 = vst [vmem:[#allocation4 + $0x120] sm:$0xff] %v627
    %1337 = vst [vmem:[#allocation4 + $0x128] sm:$0xff] %v978
    %1338 = vst [vmem:[#allocation4 + $0x130] sm:$0xff] %v980
    %1339 = vst [vmem:[#allocation4 + $0x138] sm:$0xff] %v631
    %1340 = vst [vmem:[#allocation4 + $0x140] sm:$0xff] %v982
    %1341 = vst [vmem:[#allocation4 + $0x148] sm:$0xff] %v984
    %1342 = vst [vmem:[#allocation4 + $0x150] sm:$0xff] %v637
    %1343 = vst [vmem:[#allocation4 + $0x158] sm:$0xff] %v988
    %1344 = vst [vmem:[#allocation4 + $0x160] sm:$0xff] %v990
    %1345 = vst [vmem:[#allocation4 + $0x168] sm:$0xff] %v641
    %1346 = vst [vmem:[#allocation4 + $0x170] sm:$0xff] %v992
    %1347 = vst [vmem:[#allocation4 + $0x178] sm:$0xff] %v994
    %1348 = vst [vmem:[#allocation4 + $0x180] sm:$0xff] %v647
    %1349 = vst [vmem:[#allocation4 + $0x188] sm:$0xff] %v998
    %1350 = vst [vmem:[#allocation4 + $0x190] sm:$0xff] %v1000
    %1351 = vst [vmem:[#allocation4 + $0x198] sm:$0xff] %v651
    %1352 = vst [vmem:[#allocation4 + $0x1a0] sm:$0xff] %v1002
    %1353 = vst [vmem:[#allocation4 + $0x1a8] sm:$0xff] %v1004
    %1354 = vst [vmem:[#allocation4 + $0x1b0] sm:$0xff] %v657
    %1355 = vst [vmem:[#allocation4 + $0x1b8] sm:$0xff] %v1008
    %1356 = vst [vmem:[#allocation4 + $0x1c0] sm:$0xff] %v1010
    %1357 = vst [vmem:[#allocation4 + $0x1c8] sm:$0xff] %v661
    %1358 = vst [vmem:[#allocation4 + $0x1d0] sm:$0xff] %v1012
    %1359 = vst [vmem:[#allocation4 + $0x1d8] sm:$0xff] %v1014
    %1360 = vst [vmem:[#allocation4 + $0x1e0] sm:$0xff] %v667
    %1361 = vst [vmem:[#allocation4 + $0x1e8] sm:$0xff] %v1018
    %1362 = vst [vmem:[#allocation4 + $0x1f0] sm:$0xff] %v1020
    %1363 = vst [vmem:[#allocation4 + $0x1f8] sm:$0xff] %v671
    %1364 = vst [vmem:[#allocation4 + $0x200] sm:$0xff] %v1022
    %1365 = vst [vmem:[#allocation4 + $0x208] sm:$0xff] %v1024
    %1366 = vst [vmem:[#allocation4 + $0x210] sm:$0xff] %v677
    %1367 = vst [vmem:[#allocation4 + $0x218] sm:$0xff] %v1028
    %1368 = vst [vmem:[#allocation4 + $0x220] sm:$0xff] %v1030
    %1369 = vst [vmem:[#allocation4 + $0x228] sm:$0xff] %v681
    %1370 = vst [vmem:[#allocation4 + $0x230] sm:$0xff] %v1032
    %1371 = vst [vmem:[#allocation4 + $0x238] sm:$0xff] %v1034
    %1372 = vst [vmem:[#allocation4 + $0x240] sm:$0xff] %v687
    %1373 = vst [vmem:[#allocation4 + $0x248] sm:$0xff] %v1038
    %1374 = vst [vmem:[#allocation4 + $0x250] sm:$0xff] %v1040
    %1375 = vst [vmem:[#allocation4 + $0x258] sm:$0xff] %v691
    %1376 = vst [vmem:[#allocation4 + $0x260] sm:$0xff] %v1042
    %1377 = vst [vmem:[#allocation4 + $0x268] sm:$0xff] %v1044
    %1378 = vst [vmem:[#allocation4 + $0x270] sm:$0xff] %v697
    %1379 = vst [vmem:[#allocation4 + $0x278] sm:$0xff] %v1048
    %1380 = vst [vmem:[#allocation4 + $0x280] sm:$0xff] %v1050
    %1381 = vst [vmem:[#allocation4 + $0x288] sm:$0xff] %v701
    %1382 = vst [vmem:[#allocation4 + $0x290] sm:$0xff] %v1052
    %1383 = vst [vmem:[#allocation4 + $0x298] sm:$0xff] %v1054
    %1384 = vst [vmem:[#allocation4 + $0x2a0] sm:$0xff] %v707
    %1385 = vst [vmem:[#allocation4 + $0x2a8] sm:$0xff] %v1058
    %1386 = vst [vmem:[#allocation4 + $0x2b0] sm:$0xff] %v1060
    %1387 = vst [vmem:[#allocation4 + $0x2b8] sm:$0xff] %v711
    %1388 = vst [vmem:[#allocation4 + $0x2c0] sm:$0xff] %v1062
    %1389 = vst [vmem:[#allocation4 + $0x2c8] sm:$0xff] %v1064
    %1390 = vst [vmem:[#allocation4 + $0x2d0] sm:$0xff] %v717
    %1391 = vst [vmem:[#allocation4 + $0x2d8] sm:$0xff] %v1068
    %1392 = vst [vmem:[#allocation4 + $0x2e0] sm:$0xff] %v1070
    %1393 = vst [vmem:[#allocation4 + $0x2e8] sm:$0xff] %v721
    %1394 = vst [vmem:[#allocation4 + $0x2f0] sm:$0xff] %v1072
    %1395 = vst [vmem:[#allocation4 + $0x2f8] sm:$0xff] %v1074
    %1396 = vst [vmem:[#allocation4 + $0x300] sm:$0xff] %v727
    %1397 = vst [vmem:[#allocation4 + $0x308] sm:$0xff] %v1078
    %1398 = vst [vmem:[#allocation4 + $0x310] sm:$0xff] %v1080
    %1399 = vst [vmem:[#allocation4 + $0x318] sm:$0xff] %v731
    %1400 = vst [vmem:[#allocation4 + $0x320] sm:$0xff] %v1082
    %1401 = vst [vmem:[#allocation4 + $0x328] sm:$0xff] %v1084
    %1402 = vst [vmem:[#allocation4 + $0x330] sm:$0xff] %v737
    %1403 = vst [vmem:[#allocation4 + $0x338] sm:$0xff] %v1088
    %1404 = vst [vmem:[#allocation4 + $0x340] sm:$0xff] %v1090
    %1405 = vst [vmem:[#allocation4 + $0x348] sm:$0xff] %v741
    %1406 = vst [vmem:[#allocation4 + $0x350] sm:$0xff] %v1092
    %1407 = vst [vmem:[#allocation4 + $0x358] sm:$0xff] %v1094
    %1408 = vst [vmem:[#allocation4 + $0x360] sm:$0xff] %v747
    %1409 = vst [vmem:[#allocation4 + $0x368] sm:$0xff] %v1098
    %1410 = vst [vmem:[#allocation4 + $0x370] sm:$0xff] %v1100
    %1411 = vst [vmem:[#allocation4 + $0x378] sm:$0xff] %v751
    %1412 = vst [vmem:[#allocation4 + $0x380] sm:$0xff] %v1102
    %1413 = vst [vmem:[#allocation4 + $0x388] sm:$0xff] %v1104
    %1414 = vst [vmem:[#allocation4 + $0x390] sm:$0xff] %v757
    %1415 = vst [vmem:[#allocation4 + $0x398] sm:$0xff] %v1108
    %1416 = vst [vmem:[#allocation4 + $0x3a0] sm:$0xff] %v1110
    %1417 = vst [vmem:[#allocation4 + $0x3a8] sm:$0xff] %v761
    %1418 = vst [vmem:[#allocation4 + $0x3b0] sm:$0xff] %v1112
    %1419 = vst [vmem:[#allocation4 + $0x3b8] sm:$0xff] %v1114
    %1420 = vst [vmem:[#allocation4 + $0x3c0] sm:$0xff] %v767
    %1421 = vst [vmem:[#allocation4 + $0x3c8] sm:$0xff] %v1118
    %1422 = vst [vmem:[#allocation4 + $0x3d0] sm:$0xff] %v1120
    %1423 = vst [vmem:[#allocation4 + $0x3d8] sm:$0xff] %v771
    %1424 = vst [vmem:[#allocation4 + $0x3e0] sm:$0xff] %v1122
    %1425 = vst [vmem:[#allocation4 + $0x3e8] sm:$0xff] %v1124
    %1426 = vst [vmem:[#allocation4 + $0x3f0] sm:$0xff] %v777
    %1427 = vst [vmem:[#allocation4 + $0x3f8] sm:$0xff] %v1128
    %1428 = vst [vmem:[#allocation4 + $0x400] sm:$0xff] %v1130
    %1429 = vst [vmem:[#allocation4 + $0x408] sm:$0xff] %v781
    %1430 = vst [vmem:[#allocation4 + $0x410] sm:$0xff] %v1132
    %1431 = vst [vmem:[#allocation4 + $0x418] sm:$0xff] %v1134
    %1432 = vst [vmem:[#allocation4 + $0x420] sm:$0xff] %v787
    %1433 = vst [vmem:[#allocation4 + $0x428] sm:$0xff] %v1138
    %1434 = vst [vmem:[#allocation4 + $0x430] sm:$0xff] %v1140
    %1435 = vst [vmem:[#allocation4 + $0x438] sm:$0xff] %v791
    %1436 = vst [vmem:[#allocation4 + $0x440] sm:$0xff] %v1142
    %1437 = vst [vmem:[#allocation4 + $0x448] sm:$0xff] %v1144
    %1438 = vst [vmem:[#allocation4 + $0x450] sm:$0xff] %v797
    %1439 = vst [vmem:[#allocation4 + $0x458] sm:$0xff] %v1148
    %1440 = vst [vmem:[#allocation4 + $0x460] sm:$0xff] %v1150
    %1441 = vst [vmem:[#allocation4 + $0x468] sm:$0xff] %v801
    %1442 = vst [vmem:[#allocation4 + $0x470] sm:$0xff] %v1152
    %1443 = vst [vmem:[#allocation4 + $0x478] sm:$0xff] %v1154
    %1444 = vst [vmem:[#allocation4 + $0x480] sm:$0xff] %v807
    %1445 = vst [vmem:[#allocation4 + $0x488] sm:$0xff] %v1158
    %1446 = vst [vmem:[#allocation4 + $0x490] sm:$0xff] %v1160
    %1447 = vst [vmem:[#allocation4 + $0x498] sm:$0xff] %v811
    %1448 = vst [vmem:[#allocation4 + $0x4a0] sm:$0xff] %v1162
    %1449 = vst [vmem:[#allocation4 + $0x4a8] sm:$0xff] %v1164
    %1450 = vst [vmem:[#allocation4 + $0x4b0] sm:$0xff] %v817
    %1451 = vst [vmem:[#allocation4 + $0x4b8] sm:$0xff] %v1168
    %1452 = vst [vmem:[#allocation4 + $0x4c0] sm:$0xff] %v1170
    %1453 = vst [vmem:[#allocation4 + $0x4c8] sm:$0xff] %v821
    %1454 = vst [vmem:[#allocation4 + $0x4d0] sm:$0xff] %v1172
    %1455 = vst [vmem:[#allocation4 + $0x4d8] sm:$0xff] %v1174
    %1456 = vst [vmem:[#allocation4 + $0x4e0] sm:$0xff] %v827
    %1457 = vst [vmem:[#allocation4 + $0x4e8] sm:$0xff] %v1178
    %1458 = vst [vmem:[#allocation4 + $0x4f0] sm:$0xff] %v1180
    %1459 = vst [vmem:[#allocation4 + $0x4f8] sm:$0xff] %v831
    %1460 = vst [vmem:[#allocation4 + $0x500] sm:$0xff] %v1182
    %1461 = vst [vmem:[#allocation4 + $0x508] sm:$0xff] %v1184
    %1462 = vst [vmem:[#allocation4 + $0x510] sm:$0xff] %v837
    %1463 = vst [vmem:[#allocation4 + $0x518] sm:$0xff] %v1188
    %1464 = vst [vmem:[#allocation4 + $0x520] sm:$0xff] %v1190
    %1465 = vst [vmem:[#allocation4 + $0x528] sm:$0xff] %v841
    %1466 = vst [vmem:[#allocation4 + $0x530] sm:$0xff] %v1192
    %1467 = vst [vmem:[#allocation4 + $0x538] sm:$0xff] %v1194
    %1468 = vst [vmem:[#allocation4 + $0x540] sm:$0xff] %v847
    %1469 = vst [vmem:[#allocation4 + $0x548] sm:$0xff] %v1198
    %1470 = vst [vmem:[#allocation4 + $0x550] sm:$0xff] %v1200
    %1471 = vst [vmem:[#allocation4 + $0x558] sm:$0xff] %v851
    %1472 = vst [vmem:[#allocation4 + $0x560] sm:$0xff] %v1202
    %1473 = vst [vmem:[#allocation4 + $0x568] sm:$0xff] %v1204
    %1474 = vst [vmem:[#allocation4 + $0x570] sm:$0xff] %v857
    %1475 = vst [vmem:[#allocation4 + $0x578] sm:$0xff] %v1208
    %1476 = vst [vmem:[#allocation4 + $0x580] sm:$0xff] %v1210
    %1477 = vst [vmem:[#allocation4 + $0x588] sm:$0xff] %v861
    %1478 = vst [vmem:[#allocation4 + $0x590] sm:$0xff] %v1212
    %1479 = vst [vmem:[#allocation4 + $0x598] sm:$0xff] %v1214
    %1480 = vst [vmem:[#allocation4 + $0x5a0] sm:$0xff] %v867
    %1481 = vst [vmem:[#allocation4 + $0x5a8] sm:$0xff] %v1218
    %1482 = vst [vmem:[#allocation4 + $0x5b0] sm:$0xff] %v1220
    %1483 = vst [vmem:[#allocation4 + $0x5b8] sm:$0xff] %v871
    %1484 = vst [vmem:[#allocation4 + $0x5c0] sm:$0xff] %v1222
    %1485 = vst [vmem:[#allocation4 + $0x5c8] sm:$0xff] %v1224
    %1486 = vst [vmem:[#allocation4 + $0x5d0] sm:$0xff] %v877
    %1487 = vst [vmem:[#allocation4 + $0x5d8] sm:$0xff] %v1228
    %1488 = vst [vmem:[#allocation4 + $0x5e0] sm:$0xff] %v1230
    %1489 = vst [vmem:[#allocation4 + $0x5e8] sm:$0xff] %v881
    %1490 = vst [vmem:[#allocation4 + $0x5f0] sm:$0xff] %v1232
    %1491 = vst [vmem:[#allocation4 + $0x5f8] sm:$0xff] %v1234
    // Predicated region
    $region14: #{tpu_custom_call.1} parent=1 // pred_check
      _
    $region15: #{tpu_custom_call.1} parent=1 // pred_check_branch
      %1493 = sbr.rel (0) target = $region17
    $region16: #{tpu_custom_call.1} parent=1 // pred_region
      %s1495 = ssub.s32 8192, 8192
      %1496 = vsyncadd [#allocation3], %s1495
      %s1497 = sshll.u32 [#allocation2], 4
      %s1498 = int_to_ptr.vmem [resolvable:$true] %s1497
      %1503 = dma.vmem_to_hbm [thread:$0]  %s1498, 8192, %s3, [#allocation3], 128, 128, 8
    $region17: #{tpu_custom_call.1} parent=1 // pred_fallthru
      _
    // Predicated region
    $region18: #{tpu_custom_call.1} parent=1 // pred_check
      _
    $region19: #{tpu_custom_call.1} parent=1 // pred_check_branch
      %1505 = sbr.rel (0) target = $region21
    $region20: #{tpu_custom_call.1} parent=1 // pred_region
      %s1507 = ssub.s32 24576, 24576
      %1508 = vsyncadd [#allocation5], %s1507
      %s1509 = sshll.u32 [#allocation4], 4
      %s1510 = int_to_ptr.vmem [resolvable:$true] %s1509
      %1515 = dma.vmem_to_hbm [thread:$0]  %s1510, 24576, %s4, [#allocation5], 384, 384, 24
    $region21: #{tpu_custom_call.1} parent=1 // pred_fallthru
      _
    // Predicated region
    $region22: #{tpu_custom_call.1} parent=1 // pred_check
      _
    $region23: #{tpu_custom_call.1} parent=1 // pred_check_branch
      %1517 = sbr.rel (0) target = $region25
    $region24: #{tpu_custom_call.1} parent=1 // pred_region
      %1518 = dma.done [#allocation3], 8192
    $region25: #{tpu_custom_call.1} parent=1 // pred_fallthru
      _
    // Predicated region
    $region26: #{tpu_custom_call.1} parent=1 // pred_check
      _
    $region27: #{tpu_custom_call.1} parent=1 // pred_check_branch
      %1520 = sbr.rel (0) target = $region29
    $region28: #{tpu_custom_call.1} parent=1 // pred_region
      %1521 = dma.done [#allocation5], 24576
    $region29: #{tpu_custom_call.1} parent=1 // pred_fallthru
      _
    %1522 = vsyncpa [#allocation3], 1
    %1523 = vsyncpa [#allocation5], 1

</llo_original>
